<compile_context>
chip_gen: v5e
topology: v5e:2x2
jax: 0.10.0
libtpu: 0.0.40
codegen_flags: <defaults>
</compile_context>

<pallas_src>
import jax
import jax.numpy as jnp
import numpy as np
from jax.experimental import pallas as pl
from jax.experimental.pallas import tpu as pltpu

DENSE   = 16   # dense_neurons
DENSE_E = 32   # dense_neurons_E
DECAY   = 10   # netDecay_neurons
Z  = 1.0       # params['Z']
RY = 0.0       # params['Ry']
RZ = 0.0       # params['Rz']
P  = 1.0       # params['inversion_symmetry']


def nn_atom_kernel(inp_ref,
                   we1_ref, be1_ref, we2_ref, be2_ref, weo_ref, beo_ref,
                   wh1_ref, bh1_ref, wh2_ref, bh2_ref, wo_ref, bo_ref,
                   wdl_ref, bdl_ref, wd_ref, bd_ref,
                   out_ref):
    inp = inp_ref[...]                       # (4, T)  rows: x, y, z, R
    x = inp[0:1, :]
    y = inp[1:2, :]
    z = inp[2:3, :]
    R = inp[3:4, :]
    T = x.shape[1]

    def sig(v):
        # sigmoid(v) == 0.5 * (tanh(v/2) + 1): one EUP pass instead of exp + divide.
        return 0.5 * (jnp.tanh(0.5 * v) + 1.0)

    # ---------------- E branch: Lin_E1 -> sig -> Lin_E2 -> sig -> Lin_Eout ---
    # Lin_E1 has in_features=1 -> rank-1 broadcast multiply-add, no MXU needed.
    e = sig(we1_ref[...] * R + be1_ref[...])                                   # (32, T)
    e = sig(jnp.dot(we2_ref[...], e, preferred_element_type=jnp.float32)
            + be2_ref[...])                                                    # (32, T)
    E = (jnp.dot(weo_ref[...], e, preferred_element_type=jnp.float32)
         + beo_ref[...])                                                       # (1, T)

    # ---------------- atomicUnit (Z=1 -> only the '1s' orbital) --------------
    def atomic(xx):
        r1 = jnp.sqrt((xx - R) ** 2 + (y - RY) ** 2 + (z - RZ) ** 2)
        r2 = jnp.sqrt((xx + R) ** 2 + (y + RY) ** 2 + (z + RZ) ** 2)
        return (Z ** 1.5) * jnp.exp(-r1 * Z), (Z ** 1.5) * jnp.exp(-r2 * Z)

    fi_r1, fi_r2 = atomic(x)          # atomicUnit(x, y, z, R)
    fi_r1m, fi_r2m = atomic(-x)       # atomicUnit(-x, y, z, R)

    # LCAO: fi_r1 + P*fi_r2 (real)
    N_LCAO = fi_r1 + P * fi_r2

    # ---------------- base(): Lin_H1 -> sig -> Lin_H2 -> sig -----------------
    wh1 = wh1_ref[...]                # (16, 2)
    bh1 = bh1_ref[...]                # (16, 1)
    # Lin_H1 of cat([a, b], 1) in lane-dense layout is a rank-1 broadcast MAC.
    h_a = sig(wh1[:, 0:1] * fi_r1 + wh1[:, 1:2] * fi_r2 + bh1)                 # (16, T)
    h_b = sig(wh1[:, 0:1] * fi_r1m + wh1[:, 1:2] * fi_r2m + bh1)               # (16, T)
    # Fuse the two base() Lin_H2 matmuls along the lane (batch) axis.
    h = jnp.concatenate([h_a, h_b], axis=1)                                    # (16, 2T)
    # TODO(synk): if profiling shows MXU push latency binding, this K=16 dot
    # (and the K=10 decay dot below) could be unrolled as VPU broadcast MACs.
    h = sig(jnp.dot(wh2_ref[...], h, preferred_element_type=jnp.float32)
            + bh2_ref[...])                                                    # (16, 2T)
    B = h[:, :T] + P * h[:, T:]                                                # (16, T)
    NN = (jnp.dot(wo_ref[...], B, preferred_element_type=jnp.float32)
          + bo_ref[...])                                                       # (1, T)

    # ---------------- decay net: netDecayL -> sig -> netDecay ---------------
    f = sig(wdl_ref[...] * R + bdl_ref[...])                                   # (10, T)
    f = (jnp.dot(wd_ref[...], f, preferred_element_type=jnp.float32)
         + bd_ref[...])                                                        # (1, T)

    # Packed output rows: Nout, E, orb1 (fi_r1), orb2 (fi_r2).
    out_ref[...] = jnp.concatenate([NN * f + N_LCAO, E, fi_r1, fi_r2], axis=0)


def init_weights(key):
    """Deterministic init mirroring torch.nn.Linear defaults (U(-1/sqrt(in), +)).

    Weights are stored in torch orientation (out_features, in_features);
    biases as (out_features, 1) columns for the lane-dense kernel layout.
    """
    def linear(k, fan_in, fan_out, bias_const=None):
        k1, k2 = jax.random.split(k)
        bound = 1.0 / np.sqrt(fan_in)
        W = jax.random.uniform(k1, (fan_out, fan_in), jnp.float32, -bound, bound)
        if bias_const is None:
            b = jax.random.uniform(k2, (fan_out, 1), jnp.float32, -bound, bound)
        else:
            b = jnp.full((fan_out, 1), bias_const, jnp.float32)
        return W, b

    ks = jax.random.split(key, 8)
    WE1, bE1 = linear(ks[0], 1, DENSE_E)
    WE2, bE2 = linear(ks[1], DENSE_E, DENSE_E)
    WEo, bEo = linear(ks[2], DENSE_E, 1, bias_const=-1.0)   # Lin_Eout.bias[0] = -1
    WH1, bH1 = linear(ks[3], 2, DENSE)
    WH2, bH2 = linear(ks[4], DENSE, DENSE)
    Wo,  bo  = linear(ks[5], DENSE, 1)
    WdL, bdL = linear(ks[6], 1, DECAY)
    Wd,  bd  = linear(ks[7], DECAY, 1)
    return (WE1, bE1, WE2, bE2, WEo, bEo, WH1, bH1, WH2, bH2,
            Wo, bo, WdL, bdL, Wd, bd)


def nn_atom_forward_packed(inp, weights, tile=256):
    """inp: packed (4, N) float32 rows [x; y; z; R] (lane-dense batch).

    Returns packed (4, N): rows [Nout; E; orbArray[:,0]; orbArray[:,1]].
    """
    F, N = inp.shape
    assert F == 4
    assert tile % 128 == 0 and N % tile == 0
    grid = (N // tile,)   # keep >= 2 steps so a v7x second TensorCore gets work

    io_spec = pl.BlockSpec((4, tile), lambda i: (0, i))
    # Full (untiled) weights; constant index_map -> fetched once, not per step.
    w_specs = [pl.BlockSpec(w.shape, lambda i: (0, 0)) for w in weights]

    out = pl.pallas_call(
        nn_atom_kernel,
        out_shape=jax.ShapeDtypeStruct((4, N), jnp.float32),
        grid_spec=pltpu.PrefetchScalarGridSpec(
            num_scalar_prefetch=0,
            grid=grid,
            in_specs=[io_spec] + w_specs,
            out_specs=io_spec,
        ),
        compiler_params=pltpu.CompilerParams(dimension_semantics=("parallel",)),
    )(inp, *weights)
    return out


def nn_atom_forward(x, y, z, R, weights, tile=256):
    """Compatibility wrapper using the torch (N,1)-column convention."""
    inp = jnp.concatenate([x, y, z, R], axis=1).T        # (4, N), lane-dense batch
    out = nn_atom_forward_packed(inp, weights, tile=tile)
    nout = out[0:1, :].T
    E = out[1:2, :].T
    orbArray = out[2:4, :].T                             # (N, 2)
    return nout, E, orbArray


def ref_forward_packed(inp, weights):
    """Pure-JAX reference of the torch forward, in the packed (F, N) layout."""
    (WE1, bE1, WE2, bE2, WEo, bEo, WH1, bH1, WH2, bH2,
     Wo, bo, WdL, bdL, Wd, bd) = weights
    x, y, z, R = inp[0:1], inp[1:2], inp[2:3], inp[3:4]
    sig = jax.nn.sigmoid

    e = sig(WE1 @ R + bE1)
    e = sig(WE2 @ e + bE2)
    E = WEo @ e + bEo

    def atomic(xx):
        r1 = jnp.sqrt((xx - R) ** 2 + (y - RY) ** 2 + (z - RZ) ** 2)
        r2 = jnp.sqrt((xx + R) ** 2 + (y + RY) ** 2 + (z + RZ) ** 2)
        return (Z ** 1.5) * jnp.exp(-r1 * Z), (Z ** 1.5) * jnp.exp(-r2 * Z)

    f1, f2 = atomic(x)
    f1m, f2m = atomic(-x)
    N_LCAO = f1 + P * f2

    def base(a, b):
        fr = jnp.concatenate([a, b], axis=0)     # (2, N)
        h = sig(WH1 @ fr + bH1)
        return sig(WH2 @ h + bH2)

    B = base(f1, f2) + P * base(f1m, f2m)
    NN = Wo @ B + bo
    f = sig(WdL @ R + bdL)
    f = Wd @ f + bd
    return jnp.concatenate([NN * f + N_LCAO, E, f1, f2], axis=0)


if __name__ == "__main__":
    key = jax.random.PRNGKey(0)
    k_w, k_x, k_y, k_z, k_r = jax.random.split(key, 5)

    N = 512
    x = jax.random.uniform(k_x, (1, N), jnp.float32, -5.0, 5.0)
    y = jax.random.uniform(k_y, (1, N), jnp.float32, -5.0, 5.0)
    z = jax.random.uniform(k_z, (1, N), jnp.float32, -5.0, 5.0)
    R = jax.random.uniform(k_r, (1, N), jnp.float32, 0.2, 4.0)
    inp = jnp.concatenate([x, y, z, R], axis=0)          # packed (4, N)

    weights = init_weights(k_w)

    out = nn_atom_forward_packed(inp, weights, tile=256)  # grid = (2,)
    jax.block_until_ready(out)

    out_ref = ref_forward_packed(inp, weights)
    np.testing.assert_allclose(np.asarray(out), np.asarray(out_ref),
                               rtol=1e-5, atol=1e-5)

    print("KERNEL_OK")
</pallas_src>

<mosaic_0001>
module attributes {stable_mosaic.version = 11 : i64} {
  func.func @nn_atom_kernel(%arg0: i32, %arg1: memref<4x256xf32, #tpu.memory_space<vmem>>, %arg2: memref<32x1xf32, #tpu.memory_space<vmem>>, %arg3: memref<32x1xf32, #tpu.memory_space<vmem>>, %arg4: memref<32x32xf32, #tpu.memory_space<vmem>>, %arg5: memref<32x1xf32, #tpu.memory_space<vmem>>, %arg6: memref<1x32xf32, #tpu.memory_space<vmem>>, %arg7: memref<1x1xf32, #tpu.memory_space<vmem>>, %arg8: memref<16x2xf32, #tpu.memory_space<vmem>>, %arg9: memref<16x1xf32, #tpu.memory_space<vmem>>, %arg10: memref<16x16xf32, #tpu.memory_space<vmem>>, %arg11: memref<16x1xf32, #tpu.memory_space<vmem>>, %arg12: memref<1x16xf32, #tpu.memory_space<vmem>>, %arg13: memref<1x1xf32, #tpu.memory_space<vmem>>, %arg14: memref<10x1xf32, #tpu.memory_space<vmem>>, %arg15: memref<10x1xf32, #tpu.memory_space<vmem>>, %arg16: memref<1x10xf32, #tpu.memory_space<vmem>>, %arg17: memref<1x1xf32, #tpu.memory_space<vmem>>, %arg18: memref<4x256xf32, #tpu.memory_space<vmem>>) attributes {dimension_semantics = [#tpu.dimension_semantics<parallel>], iteration_bounds = array<i64: 2>, scalar_prefetch = 0 : i64, scratch_operands = 0 : i64, tpu.core_type = #tpu.core_type<tc>, window_params = [{transform_indices = @transform_0, window_bounds = array<i64: 4, 256>}, {pipeline_mode = #tpu.pipeline_mode<synchronous>, transform_indices = @transform_1, window_bounds = array<i64: 32, 1>}, {pipeline_mode = #tpu.pipeline_mode<synchronous>, transform_indices = @transform_2, window_bounds = array<i64: 32, 1>}, {pipeline_mode = #tpu.pipeline_mode<synchronous>, transform_indices = @transform_3, window_bounds = array<i64: 32, 32>}, {pipeline_mode = #tpu.pipeline_mode<synchronous>, transform_indices = @transform_4, window_bounds = array<i64: 32, 1>}, {pipeline_mode = #tpu.pipeline_mode<synchronous>, transform_indices = @transform_5, window_bounds = array<i64: 1, 32>}, {pipeline_mode = #tpu.pipeline_mode<synchronous>, transform_indices = @transform_6, window_bounds = array<i64: 1, 1>}, {pipeline_mode = #tpu.pipeline_mode<synchronous>, transform_indices = @transform_7, window_bounds = array<i64: 16, 2>}, {pipeline_mode = #tpu.pipeline_mode<synchronous>, transform_indices = @transform_8, window_bounds = array<i64: 16, 1>}, {pipeline_mode = #tpu.pipeline_mode<synchronous>, transform_indices = @transform_9, window_bounds = array<i64: 16, 16>}, {pipeline_mode = #tpu.pipeline_mode<synchronous>, transform_indices = @transform_10, window_bounds = array<i64: 16, 1>}, {pipeline_mode = #tpu.pipeline_mode<synchronous>, transform_indices = @transform_11, window_bounds = array<i64: 1, 16>}, {pipeline_mode = #tpu.pipeline_mode<synchronous>, transform_indices = @transform_12, window_bounds = array<i64: 1, 1>}, {pipeline_mode = #tpu.pipeline_mode<synchronous>, transform_indices = @transform_13, window_bounds = array<i64: 10, 1>}, {pipeline_mode = #tpu.pipeline_mode<synchronous>, transform_indices = @transform_14, window_bounds = array<i64: 10, 1>}, {pipeline_mode = #tpu.pipeline_mode<synchronous>, transform_indices = @transform_15, window_bounds = array<i64: 1, 10>}, {pipeline_mode = #tpu.pipeline_mode<synchronous>, transform_indices = @transform_16, window_bounds = array<i64: 1, 1>}, {transform_indices = @transform_17, window_bounds = array<i64: 4, 256>}]} {
    %c0 = arith.constant 0 : index
    %c0_0 = arith.constant 0 : index
    %0 = vector.load %arg1[%c0, %c0_0] : memref<4x256xf32, #tpu.memory_space<vmem>>, vector<4x256xf32>
    %1 = vector.extract_strided_slice %0 {offsets = [0, 0], sizes = [1, 256], strides = [1, 1]} : vector<4x256xf32> to vector<1x256xf32>
    %2 = vector.extract_strided_slice %0 {offsets = [1, 0], sizes = [1, 256], strides = [1, 1]} : vector<4x256xf32> to vector<1x256xf32>
    %3 = vector.extract_strided_slice %0 {offsets = [2, 0], sizes = [1, 256], strides = [1, 1]} : vector<4x256xf32> to vector<1x256xf32>
    %4 = vector.extract_strided_slice %0 {offsets = [3, 0], sizes = [1, 256], strides = [1, 1]} : vector<4x256xf32> to vector<1x256xf32>
    %c0_1 = arith.constant 0 : index
    %c0_2 = arith.constant 0 : index
    %5 = vector.load %arg2[%c0_1, %c0_2] : memref<32x1xf32, #tpu.memory_space<vmem>>, vector<32x1xf32>
    %6 = vector.broadcast %5 : vector<32x1xf32> to vector<32x256xf32>
    %7 = vector.broadcast %4 : vector<1x256xf32> to vector<32x256xf32>
    %8 = arith.mulf %6, %7 : vector<32x256xf32>
    %c0_3 = arith.constant 0 : index
    %c0_4 = arith.constant 0 : index
    %9 = vector.load %arg3[%c0_3, %c0_4] : memref<32x1xf32, #tpu.memory_space<vmem>>, vector<32x1xf32>
    %10 = vector.broadcast %9 : vector<32x1xf32> to vector<32x256xf32>
    %11 = arith.addf %8, %10 : vector<32x256xf32>
    %cst = arith.constant 5.000000e-01 : f32
    %12 = vector.broadcast %cst : f32 to vector<32x256xf32>
    %13 = arith.mulf %12, %11 : vector<32x256xf32>
    %14 = math.tanh %13 : vector<32x256xf32>
    %cst_5 = arith.constant 1.000000e+00 : f32
    %15 = vector.broadcast %cst_5 : f32 to vector<32x256xf32>
    %16 = arith.addf %14, %15 : vector<32x256xf32>
    %cst_6 = arith.constant 5.000000e-01 : f32
    %17 = vector.broadcast %cst_6 : f32 to vector<32x256xf32>
    %18 = arith.mulf %17, %16 : vector<32x256xf32>
    %c0_7 = arith.constant 0 : index
    %c0_8 = arith.constant 0 : index
    %19 = vector.load %arg4[%c0_7, %c0_8] : memref<32x32xf32, #tpu.memory_space<vmem>>, vector<32x32xf32>
    %cst_9 = arith.constant dense<0.000000e+00> : vector<32x256xf32>
    %20 = tpu.matmul %19, %18, %cst_9 {dimension_numbers = #tpu.dot_dimension_numbers<[1], [0], [0], [1], [0, 0, 1, 1], [], []>} : vector<32x32xf32>, vector<32x256xf32>, vector<32x256xf32> -> vector<32x256xf32>
    %c0_10 = arith.constant 0 : index
    %c0_11 = arith.constant 0 : index
    %21 = vector.load %arg5[%c0_10, %c0_11] : memref<32x1xf32, #tpu.memory_space<vmem>>, vector<32x1xf32>
    %22 = vector.broadcast %21 : vector<32x1xf32> to vector<32x256xf32>
    %23 = arith.addf %20, %22 : vector<32x256xf32>
    %cst_12 = arith.constant 5.000000e-01 : f32
    %24 = vector.broadcast %cst_12 : f32 to vector<32x256xf32>
    %25 = arith.mulf %24, %23 : vector<32x256xf32>
    %26 = math.tanh %25 : vector<32x256xf32>
    %cst_13 = arith.constant 1.000000e+00 : f32
    %27 = vector.broadcast %cst_13 : f32 to vector<32x256xf32>
    %28 = arith.addf %26, %27 : vector<32x256xf32>
    %cst_14 = arith.constant 5.000000e-01 : f32
    %29 = vector.broadcast %cst_14 : f32 to vector<32x256xf32>
    %30 = arith.mulf %29, %28 : vector<32x256xf32>
    %c0_15 = arith.constant 0 : index
    %c0_16 = arith.constant 0 : index
    %31 = vector.load %arg6[%c0_15, %c0_16] : memref<1x32xf32, #tpu.memory_space<vmem>>, vector<1x32xf32>
    %cst_17 = arith.constant dense<0.000000e+00> : vector<1x256xf32>
    %32 = tpu.matmul %31, %30, %cst_17 {dimension_numbers = #tpu.dot_dimension_numbers<[1], [0], [0], [1], [0, 0, 1, 1], [], []>} : vector<1x32xf32>, vector<32x256xf32>, vector<1x256xf32> -> vector<1x256xf32>
    %c0_18 = arith.constant 0 : index
    %c0_19 = arith.constant 0 : index
    %33 = vector.load %arg7[%c0_18, %c0_19] : memref<1x1xf32, #tpu.memory_space<vmem>>, vector<1x1xf32>
    %34 = vector.broadcast %33 : vector<1x1xf32> to vector<1x256xf32>
    %35 = arith.addf %32, %34 : vector<1x256xf32>
    %36 = arith.subf %1, %4 : vector<1x256xf32>
    %37 = arith.mulf %36, %36 : vector<1x256xf32>
    %cst_20 = arith.constant 0.000000e+00 : f32
    %38 = vector.broadcast %cst_20 : f32 to vector<1x256xf32>
    %39 = arith.subf %2, %38 : vector<1x256xf32>
    %40 = arith.mulf %39, %39 : vector<1x256xf32>
    %41 = arith.addf %37, %40 : vector<1x256xf32>
    %cst_21 = arith.constant 0.000000e+00 : f32
    %42 = vector.broadcast %cst_21 : f32 to vector<1x256xf32>
    %43 = arith.subf %3, %42 : vector<1x256xf32>
    %44 = arith.mulf %43, %43 : vector<1x256xf32>
    %45 = arith.addf %41, %44 : vector<1x256xf32>
    %46 = math.sqrt %45 : vector<1x256xf32>
    %47 = arith.addf %1, %4 : vector<1x256xf32>
    %48 = arith.mulf %47, %47 : vector<1x256xf32>
    %cst_22 = arith.constant 0.000000e+00 : f32
    %49 = vector.broadcast %cst_22 : f32 to vector<1x256xf32>
    %50 = arith.addf %2, %49 : vector<1x256xf32>
    %51 = arith.mulf %50, %50 : vector<1x256xf32>
    %52 = arith.addf %48, %51 : vector<1x256xf32>
    %cst_23 = arith.constant 0.000000e+00 : f32
    %53 = vector.broadcast %cst_23 : f32 to vector<1x256xf32>
    %54 = arith.addf %3, %53 : vector<1x256xf32>
    %55 = arith.mulf %54, %54 : vector<1x256xf32>
    %56 = arith.addf %52, %55 : vector<1x256xf32>
    %57 = math.sqrt %56 : vector<1x256xf32>
    %cst_24 = arith.constant 0.000000e+00 : f32
    %58 = vector.broadcast %cst_24 : f32 to vector<1x256xf32>
    %59 = arith.subf %58, %46 : vector<1x256xf32>
    %cst_25 = arith.constant 1.000000e+00 : f32
    %60 = vector.broadcast %cst_25 : f32 to vector<1x256xf32>
    %61 = arith.mulf %59, %60 : vector<1x256xf32>
    %62 = math.exp %61 : vector<1x256xf32>
    %cst_26 = arith.constant 1.000000e+00 : f32
    %63 = vector.broadcast %cst_26 : f32 to vector<1x256xf32>
    %64 = arith.mulf %63, %62 : vector<1x256xf32>
    %cst_27 = arith.constant 0.000000e+00 : f32
    %65 = vector.broadcast %cst_27 : f32 to vector<1x256xf32>
    %66 = arith.subf %65, %57 : vector<1x256xf32>
    %cst_28 = arith.constant 1.000000e+00 : f32
    %67 = vector.broadcast %cst_28 : f32 to vector<1x256xf32>
    %68 = arith.mulf %66, %67 : vector<1x256xf32>
    %69 = math.exp %68 : vector<1x256xf32>
    %cst_29 = arith.constant 1.000000e+00 : f32
    %70 = vector.broadcast %cst_29 : f32 to vector<1x256xf32>
    %71 = arith.mulf %70, %69 : vector<1x256xf32>
    %cst_30 = arith.constant 0.000000e+00 : f32
    %72 = vector.broadcast %cst_30 : f32 to vector<1x256xf32>
    %73 = arith.subf %72, %1 : vector<1x256xf32>
    %74 = arith.subf %73, %4 : vector<1x256xf32>
    %75 = arith.mulf %74, %74 : vector<1x256xf32>
    %cst_31 = arith.constant 0.000000e+00 : f32
    %76 = vector.broadcast %cst_31 : f32 to vector<1x256xf32>
    %77 = arith.subf %2, %76 : vector<1x256xf32>
    %78 = arith.mulf %77, %77 : vector<1x256xf32>
    %79 = arith.addf %75, %78 : vector<1x256xf32>
    %cst_32 = arith.constant 0.000000e+00 : f32
    %80 = vector.broadcast %cst_32 : f32 to vector<1x256xf32>
    %81 = arith.subf %3, %80 : vector<1x256xf32>
    %82 = arith.mulf %81, %81 : vector<1x256xf32>
    %83 = arith.addf %79, %82 : vector<1x256xf32>
    %84 = math.sqrt %83 : vector<1x256xf32>
    %85 = arith.addf %73, %4 : vector<1x256xf32>
    %86 = arith.mulf %85, %85 : vector<1x256xf32>
    %cst_33 = arith.constant 0.000000e+00 : f32
    %87 = vector.broadcast %cst_33 : f32 to vector<1x256xf32>
    %88 = arith.addf %2, %87 : vector<1x256xf32>
    %89 = arith.mulf %88, %88 : vector<1x256xf32>
    %90 = arith.addf %86, %89 : vector<1x256xf32>
    %cst_34 = arith.constant 0.000000e+00 : f32
    %91 = vector.broadcast %cst_34 : f32 to vector<1x256xf32>
    %92 = arith.addf %3, %91 : vector<1x256xf32>
    %93 = arith.mulf %92, %92 : vector<1x256xf32>
    %94 = arith.addf %90, %93 : vector<1x256xf32>
    %95 = math.sqrt %94 : vector<1x256xf32>
    %cst_35 = arith.constant 0.000000e+00 : f32
    %96 = vector.broadcast %cst_35 : f32 to vector<1x256xf32>
    %97 = arith.subf %96, %84 : vector<1x256xf32>
    %cst_36 = arith.constant 1.000000e+00 : f32
    %98 = vector.broadcast %cst_36 : f32 to vector<1x256xf32>
    %99 = arith.mulf %97, %98 : vector<1x256xf32>
    %100 = math.exp %99 : vector<1x256xf32>
    %cst_37 = arith.constant 1.000000e+00 : f32
    %101 = vector.broadcast %cst_37 : f32 to vector<1x256xf32>
    %102 = arith.mulf %101, %100 : vector<1x256xf32>
    %cst_38 = arith.constant 0.000000e+00 : f32
    %103 = vector.broadcast %cst_38 : f32 to vector<1x256xf32>
    %104 = arith.subf %103, %95 : vector<1x256xf32>
    %cst_39 = arith.constant 1.000000e+00 : f32
    %105 = vector.broadcast %cst_39 : f32 to vector<1x256xf32>
    %106 = arith.mulf %104, %105 : vector<1x256xf32>
    %107 = math.exp %106 : vector<1x256xf32>
    %cst_40 = arith.constant 1.000000e+00 : f32
    %108 = vector.broadcast %cst_40 : f32 to vector<1x256xf32>
    %109 = arith.mulf %108, %107 : vector<1x256xf32>
    %cst_41 = arith.constant 1.000000e+00 : f32
    %110 = vector.broadcast %cst_41 : f32 to vector<1x256xf32>
    %111 = arith.mulf %110, %71 : vector<1x256xf32>
    %112 = arith.addf %64, %111 : vector<1x256xf32>
    %c0_42 = arith.constant 0 : index
    %c0_43 = arith.constant 0 : index
    %113 = vector.load %arg8[%c0_42, %c0_43] : memref<16x2xf32, #tpu.memory_space<vmem>>, vector<16x2xf32>
    %c0_44 = arith.constant 0 : index
    %c0_45 = arith.constant 0 : index
    %114 = vector.load %arg9[%c0_44, %c0_45] : memref<16x1xf32, #tpu.memory_space<vmem>>, vector<16x1xf32>
    %115 = vector.extract_strided_slice %113 {offsets = [0, 0], sizes = [16, 1], strides = [1, 1]} : vector<16x2xf32> to vector<16x1xf32>
    %116 = vector.broadcast %115 : vector<16x1xf32> to vector<16x256xf32>
    %117 = vector.broadcast %64 : vector<1x256xf32> to vector<16x256xf32>
    %118 = arith.mulf %116, %117 : vector<16x256xf32>
    %119 = vector.extract_strided_slice %113 {offsets = [0, 1], sizes = [16, 1], strides = [1, 1]} : vector<16x2xf32> to vector<16x1xf32>
    %120 = vector.broadcast %119 : vector<16x1xf32> to vector<16x256xf32>
    %121 = vector.broadcast %71 : vector<1x256xf32> to vector<16x256xf32>
    %122 = arith.mulf %120, %121 : vector<16x256xf32>
    %123 = arith.addf %118, %122 : vector<16x256xf32>
    %124 = vector.broadcast %114 : vector<16x1xf32> to vector<16x256xf32>
    %125 = arith.addf %123, %124 : vector<16x256xf32>
    %cst_46 = arith.constant 5.000000e-01 : f32
    %126 = vector.broadcast %cst_46 : f32 to vector<16x256xf32>
    %127 = arith.mulf %126, %125 : vector<16x256xf32>
    %128 = math.tanh %127 : vector<16x256xf32>
    %cst_47 = arith.constant 1.000000e+00 : f32
    %129 = vector.broadcast %cst_47 : f32 to vector<16x256xf32>
    %130 = arith.addf %128, %129 : vector<16x256xf32>
    %cst_48 = arith.constant 5.000000e-01 : f32
    %131 = vector.broadcast %cst_48 : f32 to vector<16x256xf32>
    %132 = arith.mulf %131, %130 : vector<16x256xf32>
    %133 = vector.extract_strided_slice %113 {offsets = [0, 0], sizes = [16, 1], strides = [1, 1]} : vector<16x2xf32> to vector<16x1xf32>
    %134 = vector.broadcast %133 : vector<16x1xf32> to vector<16x256xf32>
    %135 = vector.broadcast %102 : vector<1x256xf32> to vector<16x256xf32>
    %136 = arith.mulf %134, %135 : vector<16x256xf32>
    %137 = vector.extract_strided_slice %113 {offsets = [0, 1], sizes = [16, 1], strides = [1, 1]} : vector<16x2xf32> to vector<16x1xf32>
    %138 = vector.broadcast %137 : vector<16x1xf32> to vector<16x256xf32>
    %139 = vector.broadcast %109 : vector<1x256xf32> to vector<16x256xf32>
    %140 = arith.mulf %138, %139 : vector<16x256xf32>
    %141 = arith.addf %136, %140 : vector<16x256xf32>
    %142 = vector.broadcast %114 : vector<16x1xf32> to vector<16x256xf32>
    %143 = arith.addf %141, %142 : vector<16x256xf32>
    %cst_49 = arith.constant 5.000000e-01 : f32
    %144 = vector.broadcast %cst_49 : f32 to vector<16x256xf32>
    %145 = arith.mulf %144, %143 : vector<16x256xf32>
    %146 = math.tanh %145 : vector<16x256xf32>
    %cst_50 = arith.constant 1.000000e+00 : f32
    %147 = vector.broadcast %cst_50 : f32 to vector<16x256xf32>
    %148 = arith.addf %146, %147 : vector<16x256xf32>
    %cst_51 = arith.constant 5.000000e-01 : f32
    %149 = vector.broadcast %cst_51 : f32 to vector<16x256xf32>
    %150 = arith.mulf %149, %148 : vector<16x256xf32>
    %151 = tpu.concatenate %132, %150 in 1 : vector<16x256xf32>, vector<16x256xf32> -> vector<16x512xf32>
    %c0_52 = arith.constant 0 : index
    %c0_53 = arith.constant 0 : index
    %152 = vector.load %arg10[%c0_52, %c0_53] : memref<16x16xf32, #tpu.memory_space<vmem>>, vector<16x16xf32>
    %cst_54 = arith.constant dense<0.000000e+00> : vector<16x512xf32>
    %153 = tpu.matmul %152, %151, %cst_54 {dimension_numbers = #tpu.dot_dimension_numbers<[1], [0], [0], [1], [0, 0, 1, 1], [], []>} : vector<16x16xf32>, vector<16x512xf32>, vector<16x512xf32> -> vector<16x512xf32>
    %c0_55 = arith.constant 0 : index
    %c0_56 = arith.constant 0 : index
    %154 = vector.load %arg11[%c0_55, %c0_56] : memref<16x1xf32, #tpu.memory_space<vmem>>, vector<16x1xf32>
    %155 = vector.broadcast %154 : vector<16x1xf32> to vector<16x512xf32>
    %156 = arith.addf %153, %155 : vector<16x512xf32>
    %cst_57 = arith.constant 5.000000e-01 : f32
    %157 = vector.broadcast %cst_57 : f32 to vector<16x512xf32>
    %158 = arith.mulf %157, %156 : vector<16x512xf32>
    %159 = math.tanh %158 : vector<16x512xf32>
    %cst_58 = arith.constant 1.000000e+00 : f32
    %160 = vector.broadcast %cst_58 : f32 to vector<16x512xf32>
    %161 = arith.addf %159, %160 : vector<16x512xf32>
    %cst_59 = arith.constant 5.000000e-01 : f32
    %162 = vector.broadcast %cst_59 : f32 to vector<16x512xf32>
    %163 = arith.mulf %162, %161 : vector<16x512xf32>
    %164 = vector.extract_strided_slice %163 {offsets = [0, 0], sizes = [16, 256], strides = [1, 1]} : vector<16x512xf32> to vector<16x256xf32>
    %165 = vector.extract_strided_slice %163 {offsets = [0, 256], sizes = [16, 256], strides = [1, 1]} : vector<16x512xf32> to vector<16x256xf32>
    %cst_60 = arith.constant 1.000000e+00 : f32
    %166 = vector.broadcast %cst_60 : f32 to vector<16x256xf32>
    %167 = arith.mulf %166, %165 : vector<16x256xf32>
    %168 = arith.addf %164, %167 : vector<16x256xf32>
    %c0_61 = arith.constant 0 : index
    %c0_62 = arith.constant 0 : index
    %169 = vector.load %arg12[%c0_61, %c0_62] : memref<1x16xf32, #tpu.memory_space<vmem>>, vector<1x16xf32>
    %cst_63 = arith.constant dense<0.000000e+00> : vector<1x256xf32>
    %170 = tpu.matmul %169, %168, %cst_63 {dimension_numbers = #tpu.dot_dimension_numbers<[1], [0], [0], [1], [0, 0, 1, 1], [], []>} : vector<1x16xf32>, vector<16x256xf32>, vector<1x256xf32> -> vector<1x256xf32>
    %c0_64 = arith.constant 0 : index
    %c0_65 = arith.constant 0 : index
    %171 = vector.load %arg13[%c0_64, %c0_65] : memref<1x1xf32, #tpu.memory_space<vmem>>, vector<1x1xf32>
    %172 = vector.broadcast %171 : vector<1x1xf32> to vector<1x256xf32>
    %173 = arith.addf %170, %172 : vector<1x256xf32>
    %c0_66 = arith.constant 0 : index
    %c0_67 = arith.constant 0 : index
    %174 = vector.load %arg14[%c0_66, %c0_67] : memref<10x1xf32, #tpu.memory_space<vmem>>, vector<10x1xf32>
    %175 = vector.broadcast %174 : vector<10x1xf32> to vector<10x256xf32>
    %176 = vector.broadcast %4 : vector<1x256xf32> to vector<10x256xf32>
    %177 = arith.mulf %175, %176 : vector<10x256xf32>
    %c0_68 = arith.constant 0 : index
    %c0_69 = arith.constant 0 : index
    %178 = vector.load %arg15[%c0_68, %c0_69] : memref<10x1xf32, #tpu.memory_space<vmem>>, vector<10x1xf32>
    %179 = vector.broadcast %178 : vector<10x1xf32> to vector<10x256xf32>
    %180 = arith.addf %177, %179 : vector<10x256xf32>
    %cst_70 = arith.constant 5.000000e-01 : f32
    %181 = vector.broadcast %cst_70 : f32 to vector<10x256xf32>
    %182 = arith.mulf %181, %180 : vector<10x256xf32>
    %183 = math.tanh %182 : vector<10x256xf32>
    %cst_71 = arith.constant 1.000000e+00 : f32
    %184 = vector.broadcast %cst_71 : f32 to vector<10x256xf32>
    %185 = arith.addf %183, %184 : vector<10x256xf32>
    %cst_72 = arith.constant 5.000000e-01 : f32
    %186 = vector.broadcast %cst_72 : f32 to vector<10x256xf32>
    %187 = arith.mulf %186, %185 : vector<10x256xf32>
    %c0_73 = arith.constant 0 : index
    %c0_74 = arith.constant 0 : index
    %188 = vector.load %arg16[%c0_73, %c0_74] : memref<1x10xf32, #tpu.memory_space<vmem>>, vector<1x10xf32>
    %cst_75 = arith.constant dense<0.000000e+00> : vector<1x256xf32>
    %189 = tpu.matmul %188, %187, %cst_75 {dimension_numbers = #tpu.dot_dimension_numbers<[1], [0], [0], [1], [0, 0, 1, 1], [], []>} : vector<1x10xf32>, vector<10x256xf32>, vector<1x256xf32> -> vector<1x256xf32>
    %c0_76 = arith.constant 0 : index
    %c0_77 = arith.constant 0 : index
    %190 = vector.load %arg17[%c0_76, %c0_77] : memref<1x1xf32, #tpu.memory_space<vmem>>, vector<1x1xf32>
    %191 = vector.broadcast %190 : vector<1x1xf32> to vector<1x256xf32>
    %192 = arith.addf %189, %191 : vector<1x256xf32>
    %193 = arith.mulf %173, %192 : vector<1x256xf32>
    %194 = arith.addf %193, %112 : vector<1x256xf32>
    %195 = tpu.concatenate %194, %35, %64, %71 in 0 : vector<1x256xf32>, vector<1x256xf32>, vector<1x256xf32>, vector<1x256xf32> -> vector<4x256xf32>
    %c0_78 = arith.constant 0 : index
    %c0_79 = arith.constant 0 : index
    %196 = vector.load %arg18[%c0_78, %c0_79] : memref<4x256xf32, #tpu.memory_space<vmem>>, vector<4x256xf32>
    tpu.vector_store %arg18[%c0_78, %c0_79], %195 {strides = array<i32>} : memref<4x256xf32, #tpu.memory_space<vmem>>, vector<4x256xf32>,
    return
  }
  func.func @transform_0(%arg0: i32) -> (i32, i32) {
    %c0_i32 = arith.constant 0 : i32
    %c0_i32_0 = arith.constant 0 : i32
    return %c0_i32, %arg0 : i32, i32
  }
  func.func @transform_1(%arg0: i32) -> (i32, i32) {
    %c0_i32 = arith.constant 0 : i32
    %c0_i32_0 = arith.constant 0 : i32
    %c0_i32_1 = arith.constant 0 : i32
    return %c0_i32, %c0_i32_0 : i32, i32
  }
  func.func @transform_2(%arg0: i32) -> (i32, i32) {
    %c0_i32 = arith.constant 0 : i32
    %c0_i32_0 = arith.constant 0 : i32
    %c0_i32_1 = arith.constant 0 : i32
    return %c0_i32, %c0_i32_0 : i32, i32
  }
  func.func @transform_3(%arg0: i32) -> (i32, i32) {
    %c0_i32 = arith.constant 0 : i32
    %c0_i32_0 = arith.constant 0 : i32
    %c0_i32_1 = arith.constant 0 : i32
    return %c0_i32, %c0_i32_0 : i32, i32
  }
  func.func @transform_4(%arg0: i32) -> (i32, i32) {
    %c0_i32 = arith.constant 0 : i32
    %c0_i32_0 = arith.constant 0 : i32
    %c0_i32_1 = arith.constant 0 : i32
    return %c0_i32, %c0_i32_0 : i32, i32
  }
  func.func @transform_5(%arg0: i32) -> (i32, i32) {
    %c0_i32 = arith.constant 0 : i32
    %c0_i32_0 = arith.constant 0 : i32
    %c0_i32_1 = arith.constant 0 : i32
    return %c0_i32, %c0_i32_0 : i32, i32
  }
  func.func @transform_6(%arg0: i32) -> (i32, i32) {
    %c0_i32 = arith.constant 0 : i32
    %c0_i32_0 = arith.constant 0 : i32
    %c0_i32_1 = arith.constant 0 : i32
    return %c0_i32, %c0_i32_0 : i32, i32
  }
  func.func @transform_7(%arg0: i32) -> (i32, i32) {
    %c0_i32 = arith.constant 0 : i32
    %c0_i32_0 = arith.constant 0 : i32
    %c0_i32_1 = arith.constant 0 : i32
    return %c0_i32, %c0_i32_0 : i32, i32
  }
  func.func @transform_8(%arg0: i32) -> (i32, i32) {
    %c0_i32 = arith.constant 0 : i32
    %c0_i32_0 = arith.constant 0 : i32
    %c0_i32_1 = arith.constant 0 : i32
    return %c0_i32, %c0_i32_0 : i32, i32
  }
  func.func @transform_9(%arg0: i32) -> (i32, i32) {
    %c0_i32 = arith.constant 0 : i32
    %c0_i32_0 = arith.constant 0 : i32
    %c0_i32_1 = arith.constant 0 : i32
    return %c0_i32, %c0_i32_0 : i32, i32
  }
  func.func @transform_10(%arg0: i32) -> (i32, i32) {
    %c0_i32 = arith.constant 0 : i32
    %c0_i32_0 = arith.constant 0 : i32
    %c0_i32_1 = arith.constant 0 : i32
    return %c0_i32, %c0_i32_0 : i32, i32
  }
  func.func @transform_11(%arg0: i32) -> (i32, i32) {
    %c0_i32 = arith.constant 0 : i32
    %c0_i32_0 = arith.constant 0 : i32
    %c0_i32_1 = arith.constant 0 : i32
    return %c0_i32, %c0_i32_0 : i32, i32
  }
  func.func @transform_12(%arg0: i32) -> (i32, i32) {
    %c0_i32 = arith.constant 0 : i32
    %c0_i32_0 = arith.constant 0 : i32
    %c0_i32_1 = arith.constant 0 : i32
    return %c0_i32, %c0_i32_0 : i32, i32
  }
  func.func @transform_13(%arg0: i32) -> (i32, i32) {
    %c0_i32 = arith.constant 0 : i32
    %c0_i32_0 = arith.constant 0 : i32
    %c0_i32_1 = arith.constant 0 : i32
    return %c0_i32, %c0_i32_0 : i32, i32
  }
  func.func @transform_14(%arg0: i32) -> (i32, i32) {
    %c0_i32 = arith.constant 0 : i32
    %c0_i32_0 = arith.constant 0 : i32
    %c0_i32_1 = arith.constant 0 : i32
    return %c0_i32, %c0_i32_0 : i32, i32
  }
  func.func @transform_15(%arg0: i32) -> (i32, i32) {
    %c0_i32 = arith.constant 0 : i32
    %c0_i32_0 = arith.constant 0 : i32
    %c0_i32_1 = arith.constant 0 : i32
    return %c0_i32, %c0_i32_0 : i32, i32
  }
  func.func @transform_16(%arg0: i32) -> (i32, i32) {
    %c0_i32 = arith.constant 0 : i32
    %c0_i32_0 = arith.constant 0 : i32
    %c0_i32_1 = arith.constant 0 : i32
    return %c0_i32, %c0_i32_0 : i32, i32
  }
  func.func @transform_17(%arg0: i32) -> (i32, i32) {
    %c0_i32 = arith.constant 0 : i32
    %c0_i32_0 = arith.constant 0 : i32
    return %c0_i32, %arg0 : i32, i32
  }
}

</mosaic_0001>

<llo_original>
// kernel: tpu_custom_call.1
$region0: #{tpu_custom_call.1}
  #allocation0 [shape = 'u32[]', space=smem, size = 0x4, offset = 0x4, fixed_abs, tag = 'smem constant byte address 0x4 - core index']
  #allocation1 [shape = 'u32[72,128]{1,0:T(1,128)}', space=vmem, size = 0x9000, scoped, tag = 'internal scratch']
  #allocation2 [shape = 'f32[1,1]{1,0:T(1,128)S(1)}', space=vmem, size = 0x200, scoped, tag = 'scoped memory for tpu_custom_call.1']
  #allocation3 [shape = 'f32[1,1]{1,0:T(1,128)S(1)}', space=vmem, size = 0x200, scoped, tag = 'scoped memory for tpu_custom_call.1']
  #allocation4 [shape = 'f32[1,1]{1,0:T(1,128)S(1)}', space=vmem, size = 0x200, scoped, tag = 'scoped memory for tpu_custom_call.1']
  %s0 = inlined_call_operand.vmem [shape: f32[4,512], index: 0, kind: input, shape index: {}]
  %s1 = inlined_call_operand.vmem [shape: f32[32,1], index: 1, kind: input, shape index: {}]
  %s2 = inlined_call_operand.vmem [shape: f32[32,1], index: 2, kind: input, shape index: {}]
  %s3 = inlined_call_operand.vmem [shape: f32[32,32], index: 3, kind: input, shape index: {}]
  %s4 = inlined_call_operand.vmem [shape: f32[32,1], index: 4, kind: input, shape index: {}]
  %s5 = inlined_call_operand.vmem [shape: f32[1,32], index: 5, kind: input, shape index: {}]
  %s6 = inlined_call_operand.<no memory space> [shape: f32[1,1], index: 6, kind: input, shape index: {}]
  %s7 = inlined_call_operand.vmem [shape: f32[16,2], index: 7, kind: input, shape index: {}]
  %s8 = inlined_call_operand.vmem [shape: f32[16,1], index: 8, kind: input, shape index: {}]
  %s9 = inlined_call_operand.vmem [shape: f32[16,16], index: 9, kind: input, shape index: {}]
  %s10 = inlined_call_operand.vmem [shape: f32[16,1], index: 10, kind: input, shape index: {}]
  %s11 = inlined_call_operand.vmem [shape: f32[1,16], index: 11, kind: input, shape index: {}]
  %s12 = inlined_call_operand.<no memory space> [shape: f32[1,1], index: 12, kind: input, shape index: {}]
  %s13 = inlined_call_operand.vmem [shape: f32[10,1], index: 13, kind: input, shape index: {}]
  %s14 = inlined_call_operand.vmem [shape: f32[10,1], index: 14, kind: input, shape index: {}]
  %s15 = inlined_call_operand.vmem [shape: f32[1,10], index: 15, kind: input, shape index: {}]
  %s16 = inlined_call_operand.<no memory space> [shape: f32[1,1], index: 16, kind: input, shape index: {}]
  %s17 = inlined_call_operand.hbm [shape: f32[4,512], index: 17, kind: output, shape index: {}]
  %s18 = sld [smem:[#allocation0]]
  $region101: #{tpu_custom_call.1} parent=0
    _
  %s20 = ssub.s32 1, %s18
  %s21 = scalar_select 0, %s20, %s18
  %v22 = vstv %s6
  %23 = vst [vmem:[#allocation2] sm:$0x1] %v22
  %v24 = vstv %s12
  %25 = vst [vmem:[#allocation3] sm:$0x1] %v24
  %v26 = vstv %s16
  %27 = vst [vmem:[#allocation4] sm:$0x1] %v26
  $region1: #{tpu_custom_call.1} parent=0
    #allocation5 [shape = 'u8[8192]{0}', space=vmem, size = 0x2000, scoped, tag = 'output window, operand 0']
    #allocation6 [shape = 's32[2]{0}', space=sflag, size = 0x8, scoped, tag = 'scoped memory for tpu_custom_call.1']
    %28 = vsyncpa [#allocation6], 0
    %s29 = scalar_lea.sflag [#allocation6], 1
    %30 = vsyncpa %s29, 0
    loop: start=0, step=1, limit=4
    $region2: #{tpu_custom_call.1} parent=1 // loop_pre_header
      _
    $region3: #{tpu_custom_call.1} parent=1 // loop_header
      %s32 = sphi 0, %s36
      %p33 = scmp.ge.s32.totalorder %s32, 4
      %s42 = sphi 0, %s44
      %s45 = sphi 0, %s42
      %s46 = sphi 0, %s45
      %s62 = sphi 0, %s46
      %s66 = sphi 0, %s66
      %s68 = sphi 0, %s66
      %s69 = sphi 0, %s68
      %s83 = sphi 0, %s69
      %s87 = sphi 0, %s87
      %s89 = sphi 0, %s87
      %s90 = sphi 0, %s89
      %s104 = sphi 0, %s90
      %s108 = sphi 0, %s108
      %s110 = sphi 0, %s108
      %s111 = sphi 0, %s110
      %s125 = sphi 0, %s111
      %s129 = sphi 0, %s129
      %s131 = sphi 0, %s129
      %s132 = sphi 0, %s131
      %s146 = sphi 0, %s132
      %s150 = sphi 0, %s150
      %s152 = sphi 0, %s150
      %s153 = sphi 0, %s152
      %s167 = sphi 0, %s153
      %s171 = sphi 0, %s171
      %s173 = sphi 0, %s171
      %s174 = sphi 0, %s173
      %s188 = sphi 0, %s174
      %s192 = sphi 0, %s192
      %s194 = sphi 0, %s192
      %s195 = sphi 0, %s194
      %s209 = sphi 0, %s195
      %s213 = sphi 0, %s213
      %s215 = sphi 0, %s213
      %s216 = sphi 0, %s215
      %s230 = sphi 0, %s216
      %s234 = sphi 0, %s234
      %s236 = sphi 0, %s234
      %s237 = sphi 0, %s236
      %s251 = sphi 0, %s237
      %s255 = sphi 0, %s255
      %s257 = sphi 0, %s255
      %s258 = sphi 0, %s257
      %s272 = sphi 0, %s258
      %s276 = sphi 0, %s276
      %s278 = sphi 0, %s276
      %s279 = sphi 0, %s278
      %s293 = sphi 0, %s279
      %s297 = sphi 0, %s297
      %s299 = sphi 0, %s297
      %s300 = sphi 0, %s299
      %s314 = sphi 0, %s300
      %s318 = sphi 0, %s318
      %s320 = sphi 0, %s318
      %s321 = sphi 0, %s320
      %s335 = sphi 0, %s321
      %s339 = sphi 0, %s339
      %s341 = sphi 0, %s339
      %s342 = sphi 0, %s341
      %s356 = sphi 0, %s342
      %s360 = sphi 0, %s360
      %s362 = sphi 0, %s360
      %s363 = sphi 0, %s362
      %s377 = sphi 0, %s363
      %s381 = sphi 0, %s381
      %s383 = sphi 0, %s381
      %s384 = sphi 0, %s383
      %s398 = sphi 0, %s384
      %s404 = sphi 0, %s406
      %s407 = sphi 0, %s404
      %s408 = sphi 0, %s407
      %s424 = sphi 0, %s408
    $region4: #{tpu_custom_call.1} parent=1 // loop_header_branch
      %35 = sbr.rel (%p33) target = $region8
    $region5: #{tpu_custom_call.1} parent=1 // loop_body
      %s37 = ssub.s32 %s32, 1
      %s38 = ssub.s32 %s32, 2
      %s39 = sadd.s32 %s32, 1
      %s40 = ssub.s32 %s32, %s39
      %p41 = scmp.eq.s32.totalorder %s40, 0
      %s43 = sadd.s32 %s42, 1
      %s44 = scalar_select %p41, %s42, %s43
      %p47 = pneg %p41
      %p48 = scmp.eq.s32.totalorder %s32, 1
      %p49 = por %p47, %p48
      %p50 = scmp.ne.s32.totalorder %s42, %s45
      %p51 = scmp.eq.s32.totalorder %s32, 0
      %p52 = por %p50, %p51
      %p53 = scmp.ne.s32.totalorder %s42, %s45
      %p54 = scmp.eq.s32.totalorder %s37, 1
      %p55 = por %p53, %p54
      %p56 = scmp.ne.s32.totalorder %s45, %s46
      %p57 = scmp.eq.s32.totalorder %s37, 0
      %p58 = por %p56, %p57
      %p59 = scmp.ne.s32.totalorder %s45, %s46
      %p60 = scmp.eq.s32.totalorder %s38, 1
      %p61 = por %p59, %p60
      %p63 = scmp.ne.s32.totalorder %s46, %s62
      %p64 = scmp.eq.s32.totalorder %s38, 0
      %p65 = por %p63, %p64
      %s67 = sadd.s32 %s66, 1
      %p70 = scmp.eq.s32.totalorder %s32, 1
      %p71 = scmp.ne.s32.totalorder %s66, %s68
      %p72 = scmp.eq.s32.totalorder %s32, 0
      %p73 = por %p71, %p72
      %p74 = scmp.ne.s32.totalorder %s66, %s68
      %p75 = scmp.eq.s32.totalorder %s37, 1
      %p76 = por %p74, %p75
      %p77 = scmp.ne.s32.totalorder %s68, %s69
      %p78 = scmp.eq.s32.totalorder %s37, 0
      %p79 = por %p77, %p78
      %p80 = scmp.ne.s32.totalorder %s68, %s69
      %p81 = scmp.eq.s32.totalorder %s38, 1
      %p82 = por %p80, %p81
      %p84 = scmp.ne.s32.totalorder %s69, %s83
      %p85 = scmp.eq.s32.totalorder %s38, 0
      %p86 = por %p84, %p85
      %s88 = sadd.s32 %s87, 1
      %p91 = scmp.eq.s32.totalorder %s32, 1
      %p92 = scmp.ne.s32.totalorder %s87, %s89
      %p93 = scmp.eq.s32.totalorder %s32, 0
      %p94 = por %p92, %p93
      %p95 = scmp.ne.s32.totalorder %s87, %s89
      %p96 = scmp.eq.s32.totalorder %s37, 1
      %p97 = por %p95, %p96
      %p98 = scmp.ne.s32.totalorder %s89, %s90
      %p99 = scmp.eq.s32.totalorder %s37, 0
      %p100 = por %p98, %p99
      %p101 = scmp.ne.s32.totalorder %s89, %s90
      %p102 = scmp.eq.s32.totalorder %s38, 1
      %p103 = por %p101, %p102
      %p105 = scmp.ne.s32.totalorder %s90, %s104
      %p106 = scmp.eq.s32.totalorder %s38, 0
      %p107 = por %p105, %p106
      %s109 = sadd.s32 %s108, 1
      %p112 = scmp.eq.s32.totalorder %s32, 1
      %p113 = scmp.ne.s32.totalorder %s108, %s110
      %p114 = scmp.eq.s32.totalorder %s32, 0
      %p115 = por %p113, %p114
      %p116 = scmp.ne.s32.totalorder %s108, %s110
      %p117 = scmp.eq.s32.totalorder %s37, 1
      %p118 = por %p116, %p117
      %p119 = scmp.ne.s32.totalorder %s110, %s111
      %p120 = scmp.eq.s32.totalorder %s37, 0
      %p121 = por %p119, %p120
      %p122 = scmp.ne.s32.totalorder %s110, %s111
      %p123 = scmp.eq.s32.totalorder %s38, 1
      %p124 = por %p122, %p123
      %p126 = scmp.ne.s32.totalorder %s111, %s125
      %p127 = scmp.eq.s32.totalorder %s38, 0
      %p128 = por %p126, %p127
      %s130 = sadd.s32 %s129, 1
      %p133 = scmp.eq.s32.totalorder %s32, 1
      %p134 = scmp.ne.s32.totalorder %s129, %s131
      %p135 = scmp.eq.s32.totalorder %s32, 0
      %p136 = por %p134, %p135
      %p137 = scmp.ne.s32.totalorder %s129, %s131
      %p138 = scmp.eq.s32.totalorder %s37, 1
      %p139 = por %p137, %p138
      %p140 = scmp.ne.s32.totalorder %s131, %s132
      %p141 = scmp.eq.s32.totalorder %s37, 0
      %p142 = por %p140, %p141
      %p143 = scmp.ne.s32.totalorder %s131, %s132
      %p144 = scmp.eq.s32.totalorder %s38, 1
      %p145 = por %p143, %p144
      %p147 = scmp.ne.s32.totalorder %s132, %s146
      %p148 = scmp.eq.s32.totalorder %s38, 0
      %p149 = por %p147, %p148
      %s151 = sadd.s32 %s150, 1
      %p154 = scmp.eq.s32.totalorder %s32, 1
      %p155 = scmp.ne.s32.totalorder %s150, %s152
      %p156 = scmp.eq.s32.totalorder %s32, 0
      %p157 = por %p155, %p156
      %p158 = scmp.ne.s32.totalorder %s150, %s152
      %p159 = scmp.eq.s32.totalorder %s37, 1
      %p160 = por %p158, %p159
      %p161 = scmp.ne.s32.totalorder %s152, %s153
      %p162 = scmp.eq.s32.totalorder %s37, 0
      %p163 = por %p161, %p162
      %p164 = scmp.ne.s32.totalorder %s152, %s153
      %p165 = scmp.eq.s32.totalorder %s38, 1
      %p166 = por %p164, %p165
      %p168 = scmp.ne.s32.totalorder %s153, %s167
      %p169 = scmp.eq.s32.totalorder %s38, 0
      %p170 = por %p168, %p169
      %s172 = sadd.s32 %s171, 1
      %p175 = scmp.eq.s32.totalorder %s32, 1
      %p176 = scmp.ne.s32.totalorder %s171, %s173
      %p177 = scmp.eq.s32.totalorder %s32, 0
      %p178 = por %p176, %p177
      %p179 = scmp.ne.s32.totalorder %s171, %s173
      %p180 = scmp.eq.s32.totalorder %s37, 1
      %p181 = por %p179, %p180
      %p182 = scmp.ne.s32.totalorder %s173, %s174
      %p183 = scmp.eq.s32.totalorder %s37, 0
      %p184 = por %p182, %p183
      %p185 = scmp.ne.s32.totalorder %s173, %s174
      %p186 = scmp.eq.s32.totalorder %s38, 1
      %p187 = por %p185, %p186
      %p189 = scmp.ne.s32.totalorder %s174, %s188
      %p190 = scmp.eq.s32.totalorder %s38, 0
      %p191 = por %p189, %p190
      %s193 = sadd.s32 %s192, 1
      %p196 = scmp.eq.s32.totalorder %s32, 1
      %p197 = scmp.ne.s32.totalorder %s192, %s194
      %p198 = scmp.eq.s32.totalorder %s32, 0
      %p199 = por %p197, %p198
      %p200 = scmp.ne.s32.totalorder %s192, %s194
      %p201 = scmp.eq.s32.totalorder %s37, 1
      %p202 = por %p200, %p201
      %p203 = scmp.ne.s32.totalorder %s194, %s195
      %p204 = scmp.eq.s32.totalorder %s37, 0
      %p205 = por %p203, %p204
      %p206 = scmp.ne.s32.totalorder %s194, %s195
      %p207 = scmp.eq.s32.totalorder %s38, 1
      %p208 = por %p206, %p207
      %p210 = scmp.ne.s32.totalorder %s195, %s209
      %p211 = scmp.eq.s32.totalorder %s38, 0
      %p212 = por %p210, %p211
      %s214 = sadd.s32 %s213, 1
      %p217 = scmp.eq.s32.totalorder %s32, 1
      %p218 = scmp.ne.s32.totalorder %s213, %s215
      %p219 = scmp.eq.s32.totalorder %s32, 0
      %p220 = por %p218, %p219
      %p221 = scmp.ne.s32.totalorder %s213, %s215
      %p222 = scmp.eq.s32.totalorder %s37, 1
      %p223 = por %p221, %p222
      %p224 = scmp.ne.s32.totalorder %s215, %s216
      %p225 = scmp.eq.s32.totalorder %s37, 0
      %p226 = por %p224, %p225
      %p227 = scmp.ne.s32.totalorder %s215, %s216
      %p228 = scmp.eq.s32.totalorder %s38, 1
      %p229 = por %p227, %p228
      %p231 = scmp.ne.s32.totalorder %s216, %s230
      %p232 = scmp.eq.s32.totalorder %s38, 0
      %p233 = por %p231, %p232
      %s235 = sadd.s32 %s234, 1
      %p238 = scmp.eq.s32.totalorder %s32, 1
      %p239 = scmp.ne.s32.totalorder %s234, %s236
      %p240 = scmp.eq.s32.totalorder %s32, 0
      %p241 = por %p239, %p240
      %p242 = scmp.ne.s32.totalorder %s234, %s236
      %p243 = scmp.eq.s32.totalorder %s37, 1
      %p244 = por %p242, %p243
      %p245 = scmp.ne.s32.totalorder %s236, %s237
      %p246 = scmp.eq.s32.totalorder %s37, 0
      %p247 = por %p245, %p246
      %p248 = scmp.ne.s32.totalorder %s236, %s237
      %p249 = scmp.eq.s32.totalorder %s38, 1
      %p250 = por %p248, %p249
      %p252 = scmp.ne.s32.totalorder %s237, %s251
      %p253 = scmp.eq.s32.totalorder %s38, 0
      %p254 = por %p252, %p253
      %s256 = sadd.s32 %s255, 1
      %p259 = scmp.eq.s32.totalorder %s32, 1
      %p260 = scmp.ne.s32.totalorder %s255, %s257
      %p261 = scmp.eq.s32.totalorder %s32, 0
      %p262 = por %p260, %p261
      %p263 = scmp.ne.s32.totalorder %s255, %s257
      %p264 = scmp.eq.s32.totalorder %s37, 1
      %p265 = por %p263, %p264
      %p266 = scmp.ne.s32.totalorder %s257, %s258
      %p267 = scmp.eq.s32.totalorder %s37, 0
      %p268 = por %p266, %p267
      %p269 = scmp.ne.s32.totalorder %s257, %s258
      %p270 = scmp.eq.s32.totalorder %s38, 1
      %p271 = por %p269, %p270
      %p273 = scmp.ne.s32.totalorder %s258, %s272
      %p274 = scmp.eq.s32.totalorder %s38, 0
      %p275 = por %p273, %p274
      %s277 = sadd.s32 %s276, 1
      %p280 = scmp.eq.s32.totalorder %s32, 1
      %p281 = scmp.ne.s32.totalorder %s276, %s278
      %p282 = scmp.eq.s32.totalorder %s32, 0
      %p283 = por %p281, %p282
      %p284 = scmp.ne.s32.totalorder %s276, %s278
      %p285 = scmp.eq.s32.totalorder %s37, 1
      %p286 = por %p284, %p285
      %p287 = scmp.ne.s32.totalorder %s278, %s279
      %p288 = scmp.eq.s32.totalorder %s37, 0
      %p289 = por %p287, %p288
      %p290 = scmp.ne.s32.totalorder %s278, %s279
      %p291 = scmp.eq.s32.totalorder %s38, 1
      %p292 = por %p290, %p291
      %p294 = scmp.ne.s32.totalorder %s279, %s293
      %p295 = scmp.eq.s32.totalorder %s38, 0
      %p296 = por %p294, %p295
      %s298 = sadd.s32 %s297, 1
      %p301 = scmp.eq.s32.totalorder %s32, 1
      %p302 = scmp.ne.s32.totalorder %s297, %s299
      %p303 = scmp.eq.s32.totalorder %s32, 0
      %p304 = por %p302, %p303
      %p305 = scmp.ne.s32.totalorder %s297, %s299
      %p306 = scmp.eq.s32.totalorder %s37, 1
      %p307 = por %p305, %p306
      %p308 = scmp.ne.s32.totalorder %s299, %s300
      %p309 = scmp.eq.s32.totalorder %s37, 0
      %p310 = por %p308, %p309
      %p311 = scmp.ne.s32.totalorder %s299, %s300
      %p312 = scmp.eq.s32.totalorder %s38, 1
      %p313 = por %p311, %p312
      %p315 = scmp.ne.s32.totalorder %s300, %s314
      %p316 = scmp.eq.s32.totalorder %s38, 0
      %p317 = por %p315, %p316
      %s319 = sadd.s32 %s318, 1
      %p322 = scmp.eq.s32.totalorder %s32, 1
      %p323 = scmp.ne.s32.totalorder %s318, %s320
      %p324 = scmp.eq.s32.totalorder %s32, 0
      %p325 = por %p323, %p324
      %p326 = scmp.ne.s32.totalorder %s318, %s320
      %p327 = scmp.eq.s32.totalorder %s37, 1
      %p328 = por %p326, %p327
      %p329 = scmp.ne.s32.totalorder %s320, %s321
      %p330 = scmp.eq.s32.totalorder %s37, 0
      %p331 = por %p329, %p330
      %p332 = scmp.ne.s32.totalorder %s320, %s321
      %p333 = scmp.eq.s32.totalorder %s38, 1
      %p334 = por %p332, %p333
      %p336 = scmp.ne.s32.totalorder %s321, %s335
      %p337 = scmp.eq.s32.totalorder %s38, 0
      %p338 = por %p336, %p337
      %s340 = sadd.s32 %s339, 1
      %p343 = scmp.eq.s32.totalorder %s32, 1
      %p344 = scmp.ne.s32.totalorder %s339, %s341
      %p345 = scmp.eq.s32.totalorder %s32, 0
      %p346 = por %p344, %p345
      %p347 = scmp.ne.s32.totalorder %s339, %s341
      %p348 = scmp.eq.s32.totalorder %s37, 1
      %p349 = por %p347, %p348
      %p350 = scmp.ne.s32.totalorder %s341, %s342
      %p351 = scmp.eq.s32.totalorder %s37, 0
      %p352 = por %p350, %p351
      %p353 = scmp.ne.s32.totalorder %s341, %s342
      %p354 = scmp.eq.s32.totalorder %s38, 1
      %p355 = por %p353, %p354
      %p357 = scmp.ne.s32.totalorder %s342, %s356
      %p358 = scmp.eq.s32.totalorder %s38, 0
      %p359 = por %p357, %p358
      %s361 = sadd.s32 %s360, 1
      %p364 = scmp.eq.s32.totalorder %s32, 1
      %p365 = scmp.ne.s32.totalorder %s360, %s362
      %p366 = scmp.eq.s32.totalorder %s32, 0
      %p367 = por %p365, %p366
      %p368 = scmp.ne.s32.totalorder %s360, %s362
      %p369 = scmp.eq.s32.totalorder %s37, 1
      %p370 = por %p368, %p369
      %p371 = scmp.ne.s32.totalorder %s362, %s363
      %p372 = scmp.eq.s32.totalorder %s37, 0
      %p373 = por %p371, %p372
      %p374 = scmp.ne.s32.totalorder %s362, %s363
      %p375 = scmp.eq.s32.totalorder %s38, 1
      %p376 = por %p374, %p375
      %p378 = scmp.ne.s32.totalorder %s363, %s377
      %p379 = scmp.eq.s32.totalorder %s38, 0
      %p380 = por %p378, %p379
      %s382 = sadd.s32 %s381, 1
      %p385 = scmp.eq.s32.totalorder %s32, 1
      %p386 = scmp.ne.s32.totalorder %s381, %s383
      %p387 = scmp.eq.s32.totalorder %s32, 0
      %p388 = por %p386, %p387
      %p389 = scmp.ne.s32.totalorder %s381, %s383
      %p390 = scmp.eq.s32.totalorder %s37, 1
      %p391 = por %p389, %p390
      %p392 = scmp.ne.s32.totalorder %s383, %s384
      %p393 = scmp.eq.s32.totalorder %s37, 0
      %p394 = por %p392, %p393
      %p395 = scmp.ne.s32.totalorder %s383, %s384
      %p396 = scmp.eq.s32.totalorder %s38, 1
      %p397 = por %p395, %p396
      %p399 = scmp.ne.s32.totalorder %s384, %s398
      %p400 = scmp.eq.s32.totalorder %s38, 0
      %p401 = por %p399, %p400
      %s402 = ssub.s32 %s32, %s39
      %p403 = scmp.eq.s32.totalorder %s402, 0
      %s405 = sadd.s32 %s404, 1
      %s406 = scalar_select %p403, %s404, %s405
      %p409 = pneg %p403
      %p410 = scmp.eq.s32.totalorder %s32, 1
      %p411 = por %p409, %p410
      %p412 = scmp.ne.s32.totalorder %s404, %s407
      %p413 = scmp.eq.s32.totalorder %s32, 0
      %p414 = por %p412, %p413
      %p415 = scmp.ne.s32.totalorder %s404, %s407
      %p416 = scmp.eq.s32.totalorder %s37, 1
      %p417 = por %p415, %p416
      %p418 = scmp.ne.s32.totalorder %s407, %s408
      %p419 = scmp.eq.s32.totalorder %s37, 0
      %p420 = por %p418, %p419
      %p421 = scmp.ne.s32.totalorder %s407, %s408
      %p422 = scmp.eq.s32.totalorder %s38, 1
      %p423 = por %p421, %p422
      %p425 = scmp.ne.s32.totalorder %s408, %s424
      %p426 = scmp.eq.s32.totalorder %s38, 0
      %p427 = por %p425, %p426
      %p428 = scmp.le.s32.totalorder 1, %s32
      %p429 = scmp.lt.s32.totalorder %s32, 3
      %p430 = pnand %p428, %p429
      %p431 = pneg %p430
      // Predicated region
      $region9: #{tpu_custom_call.1} parent=5 // pred_check
        _
      $region10: #{tpu_custom_call.1} parent=5 // pred_check_branch
        %433 = sbr.rel (%p430) target = $region12
      $region11: #{tpu_custom_call.1} parent=5 // pred_region
        %s434 = ssub.s32 %s32, 1
        // Predicated region
        $region13: #{tpu_custom_call.1} parent=11 // pred_check
          %p435 = pneg %p79
        $region14: #{tpu_custom_call.1} parent=11 // pred_check_branch
          %437 = sbr.rel (%p435) target = $region16
        $region15: #{tpu_custom_call.1} parent=11 // pred_region
          _
        $region16: #{tpu_custom_call.1} parent=11 // pred_fallthru
          _
        // Predicated region
        $region17: #{tpu_custom_call.1} parent=11 // pred_check
          %p438 = pneg %p100
        $region18: #{tpu_custom_call.1} parent=11 // pred_check_branch
          %440 = sbr.rel (%p438) target = $region20
        $region19: #{tpu_custom_call.1} parent=11 // pred_region
          _
        $region20: #{tpu_custom_call.1} parent=11 // pred_fallthru
          _
        // Predicated region
        $region21: #{tpu_custom_call.1} parent=11 // pred_check
          %p441 = pneg %p121
        $region22: #{tpu_custom_call.1} parent=11 // pred_check_branch
          %443 = sbr.rel (%p441) target = $region24
        $region23: #{tpu_custom_call.1} parent=11 // pred_region
          _
        $region24: #{tpu_custom_call.1} parent=11 // pred_fallthru
          _
        // Predicated region
        $region25: #{tpu_custom_call.1} parent=11 // pred_check
          %p444 = pneg %p142
        $region26: #{tpu_custom_call.1} parent=11 // pred_check_branch
          %446 = sbr.rel (%p444) target = $region28
        $region27: #{tpu_custom_call.1} parent=11 // pred_region
          _
        $region28: #{tpu_custom_call.1} parent=11 // pred_fallthru
          _
        // Predicated region
        $region29: #{tpu_custom_call.1} parent=11 // pred_check
          %p447 = pneg %p163
        $region30: #{tpu_custom_call.1} parent=11 // pred_check_branch
          %449 = sbr.rel (%p447) target = $region32
        $region31: #{tpu_custom_call.1} parent=11 // pred_region
          _
        $region32: #{tpu_custom_call.1} parent=11 // pred_fallthru
          _
        // Predicated region
        $region33: #{tpu_custom_call.1} parent=11 // pred_check
          %p450 = pneg %p184
        $region34: #{tpu_custom_call.1} parent=11 // pred_check_branch
          %452 = sbr.rel (%p450) target = $region36
        $region35: #{tpu_custom_call.1} parent=11 // pred_region
          _
        $region36: #{tpu_custom_call.1} parent=11 // pred_fallthru
          _
        // Predicated region
        $region37: #{tpu_custom_call.1} parent=11 // pred_check
          %p453 = pneg %p205
        $region38: #{tpu_custom_call.1} parent=11 // pred_check_branch
          %455 = sbr.rel (%p453) target = $region40
        $region39: #{tpu_custom_call.1} parent=11 // pred_region
          _
        $region40: #{tpu_custom_call.1} parent=11 // pred_fallthru
          _
        // Predicated region
        $region41: #{tpu_custom_call.1} parent=11 // pred_check
          %p456 = pneg %p226
        $region42: #{tpu_custom_call.1} parent=11 // pred_check_branch
          %458 = sbr.rel (%p456) target = $region44
        $region43: #{tpu_custom_call.1} parent=11 // pred_region
          _
        $region44: #{tpu_custom_call.1} parent=11 // pred_fallthru
          _
        // Predicated region
        $region45: #{tpu_custom_call.1} parent=11 // pred_check
          %p459 = pneg %p247
        $region46: #{tpu_custom_call.1} parent=11 // pred_check_branch
          %461 = sbr.rel (%p459) target = $region48
        $region47: #{tpu_custom_call.1} parent=11 // pred_region
          _
        $region48: #{tpu_custom_call.1} parent=11 // pred_fallthru
          _
        // Predicated region
        $region49: #{tpu_custom_call.1} parent=11 // pred_check
          %p462 = pneg %p268
        $region50: #{tpu_custom_call.1} parent=11 // pred_check_branch
          %464 = sbr.rel (%p462) target = $region52
        $region51: #{tpu_custom_call.1} parent=11 // pred_region
          _
        $region52: #{tpu_custom_call.1} parent=11 // pred_fallthru
          _
        // Predicated region
        $region53: #{tpu_custom_call.1} parent=11 // pred_check
          %p465 = pneg %p289
        $region54: #{tpu_custom_call.1} parent=11 // pred_check_branch
          %467 = sbr.rel (%p465) target = $region56
        $region55: #{tpu_custom_call.1} parent=11 // pred_region
          _
        $region56: #{tpu_custom_call.1} parent=11 // pred_fallthru
          _
        // Predicated region
        $region57: #{tpu_custom_call.1} parent=11 // pred_check
          %p468 = pneg %p310
        $region58: #{tpu_custom_call.1} parent=11 // pred_check_branch
          %470 = sbr.rel (%p468) target = $region60
        $region59: #{tpu_custom_call.1} parent=11 // pred_region
          _
        $region60: #{tpu_custom_call.1} parent=11 // pred_fallthru
          _
        // Predicated region
        $region61: #{tpu_custom_call.1} parent=11 // pred_check
          %p471 = pneg %p331
        $region62: #{tpu_custom_call.1} parent=11 // pred_check_branch
          %473 = sbr.rel (%p471) target = $region64
        $region63: #{tpu_custom_call.1} parent=11 // pred_region
          _
        $region64: #{tpu_custom_call.1} parent=11 // pred_fallthru
          _
        // Predicated region
        $region65: #{tpu_custom_call.1} parent=11 // pred_check
          %p474 = pneg %p352
        $region66: #{tpu_custom_call.1} parent=11 // pred_check_branch
          %476 = sbr.rel (%p474) target = $region68
        $region67: #{tpu_custom_call.1} parent=11 // pred_region
          _
        $region68: #{tpu_custom_call.1} parent=11 // pred_fallthru
          _
        // Predicated region
        $region69: #{tpu_custom_call.1} parent=11 // pred_check
          %p477 = pneg %p373
        $region70: #{tpu_custom_call.1} parent=11 // pred_check_branch
          %479 = sbr.rel (%p477) target = $region72
        $region71: #{tpu_custom_call.1} parent=11 // pred_region
          _
        $region72: #{tpu_custom_call.1} parent=11 // pred_fallthru
          _
        // Predicated region
        $region73: #{tpu_custom_call.1} parent=11 // pred_check
          %p480 = pneg %p394
        $region74: #{tpu_custom_call.1} parent=11 // pred_check_branch
          %482 = sbr.rel (%p480) target = $region76
        $region75: #{tpu_custom_call.1} parent=11 // pred_region
          _
        $region76: #{tpu_custom_call.1} parent=11 // pred_fallthru
          _
      $region12: #{tpu_custom_call.1} parent=5 // pred_fallthru
        _
      %p483 = scmp.lt.s32.totalorder %s32, 2
      // Predicated region
      $region77: #{tpu_custom_call.1} parent=5 // pred_check
        %p484 = pneg %p483
      $region78: #{tpu_custom_call.1} parent=5 // pred_check_branch
        %486 = sbr.rel (%p484) target = $region80
      $region79: #{tpu_custom_call.1} parent=5 // pred_region
        // Predicated region
        $region81: #{tpu_custom_call.1} parent=79 // pred_check
          %p487 = pneg %p52
        $region82: #{tpu_custom_call.1} parent=79 // pred_check_branch
          %489 = sbr.rel (%p487) target = $region84
        $region83: #{tpu_custom_call.1} parent=79 // pred_region
          %s490 = smul.u32 2, %s32
          %p491 = scmp.lt.s32.totalorder %s490, 3
          %s492 = scalar_select %p491, %s490, 3
          %s493 = smul.addr %s492, 4
          %s494 = scalar_lea.vmem %s0, %s493
          %s495 = smul.u32 2, %s32
        $region84: #{tpu_custom_call.1} parent=79 // pred_fallthru
          _
      $region80: #{tpu_custom_call.1} parent=5 // pred_fallthru
        _
      %p496 = scmp.le.s32.totalorder 1, %s32
      %p497 = scmp.lt.s32.totalorder %s32, 3
      %p498 = pnand %p496, %p497
      %p499 = pneg %p498
      // Predicated region
      $region85: #{tpu_custom_call.1} parent=5 // pred_check
        _
      $region86: #{tpu_custom_call.1} parent=5 // pred_check_branch
        %501 = sbr.rel (%p498) target = $region88
      $region87: #{tpu_custom_call.1} parent=5 // pred_region
        %s502 = ssub.s32 %s32, 1
        %s503 = smul.u32 2, %s37
        %p504 = scmp.lt.s32.totalorder %s503, 3
        %s505 = scalar_select %p504, %s503, 3
        %s506 = smul.addr %s505, 4
        %s507 = scalar_lea.vmem %s0, %s506
        %p508 = pneg %p58
        %p509 = pneg %p55
        %p510 = pneg %p79
        %p511 = pneg %p76
        %p512 = pneg %p100
        %p513 = pneg %p97
        %p514 = pneg %p121
        %p515 = pneg %p118
        %p516 = pneg %p142
        %p517 = pneg %p139
        %p518 = pneg %p163
        %p519 = pneg %p160
        %p520 = pneg %p184
        %p521 = pneg %p181
        %p522 = pneg %p205
        %p523 = pneg %p202
        %p524 = pneg %p226
        %p525 = pneg %p223
        %p526 = pneg %p247
        %p527 = pneg %p244
        %p528 = pneg %p268
        %p529 = pneg %p265
        %p530 = pneg %p289
        %p531 = pneg %p286
        %p532 = pneg %p310
        %p533 = pneg %p307
        %p534 = pneg %p331
        %p535 = pneg %p328
        %p536 = pneg %p352
        %p537 = pneg %p349
        %p538 = pneg %p373
        %p539 = pneg %p370
        %p540 = pneg %p394
        %p541 = pneg %p391
        %p542 = pneg %p420
        %p543 = pneg %p417
        %s544 = sand.u32 %s407, 1
        %s545 = scalar_lea.sflag [#allocation6], %s544
        %s546 = sand.u32 %s407, 1
        %s547 = smul.addr %s546, 8
        %s548 = scalar_lea.vmem [#allocation5], %s547
        %s549 = smul.u32 2, %s37
        %p550 = scmp.lt.s32.totalorder %s549, 3
        %s551 = scalar_select %p550, %s549, 3
        %s552 = smul.addr %s551, 4
        %s553 = scalar_lea.vmem %s0, %s552
        %s554 = smul.u32 2, %s37
        %s555 = smul.u32 2, %s37
        %v556 = vld [vmem:[%s553] sm:$0xff]
        %v557 = vld [vmem:[%s1] sm:$0xff]
        %v558 = vld [vmem:[%s1 + $0x8] sm:$0xff]
        %v559 = vld [vmem:[%s1 + $0x10] sm:$0xff]
        %v560 = vld [vmem:[%s1 + $0x18] sm:$0xff]
        %562 = vset.pattern.permute.xlu0 0
        %563 = vperm.xlu0 %562, %v557
        %v564 = vpop.permute.xlu0 %563
        %567 = vset.pattern.permute.xlu0 0
        %568 = vperm.xlu0 %567, %v558
        %v569 = vpop.permute.xlu0 %568
        %572 = vset.pattern.permute.xlu0 0
        %573 = vperm.xlu0 %572, %v559
        %v574 = vpop.permute.xlu0 %573
        %577 = vset.pattern.permute.xlu0 0
        %578 = vperm.xlu0 %577, %v560
        %v579 = vpop.permute.xlu0 %578
        %v582 = vperm.slane %v556, 3
        %v583 = vperm.slane %v556, 7
        %v586 = vperm.slane %v582, 3
        %v587 = vperm.slane %v583, 3
        %v588 = vmul.f32 %v564, %v586
        %v589 = vmul.f32 %v564, %v587
        %v590 = vmul.f32 %v569, %v586
        %v591 = vmul.f32 %v569, %v587
        %v592 = vmul.f32 %v574, %v586
        %v593 = vmul.f32 %v574, %v587
        %v594 = vmul.f32 %v579, %v586
        %v595 = vmul.f32 %v579, %v587
        %v596 = vld [vmem:[%s2] sm:$0xff]
        %v597 = vld [vmem:[%s2 + $0x8] sm:$0xff]
        %v598 = vld [vmem:[%s2 + $0x10] sm:$0xff]
        %v599 = vld [vmem:[%s2 + $0x18] sm:$0xff]
        %601 = vset.pattern.permute.xlu0 0
        %602 = vperm.xlu0 %601, %v596
        %v603 = vpop.permute.xlu0 %602
        %606 = vset.pattern.permute.xlu0 0
        %607 = vperm.xlu0 %606, %v597
        %v608 = vpop.permute.xlu0 %607
        %611 = vset.pattern.permute.xlu0 0
        %612 = vperm.xlu0 %611, %v598
        %v613 = vpop.permute.xlu0 %612
        %616 = vset.pattern.permute.xlu0 0
        %617 = vperm.xlu0 %616, %v599
        %v618 = vpop.permute.xlu0 %617
        %v620 = vadd.f32 %v588, %v603
        %v621 = vadd.f32 %v589, %v603
        %v622 = vadd.f32 %v590, %v608
        %v623 = vadd.f32 %v591, %v608
        %v624 = vadd.f32 %v592, %v613
        %v625 = vadd.f32 %v593, %v613
        %v626 = vadd.f32 %v594, %v618
        %v627 = vadd.f32 %v595, %v618
        %v628 = vmul.f32 %v620, 0.5
        %v629 = vmul.f32 %v621, 0.5
        %v630 = vmul.f32 %v622, 0.5
        %v631 = vmul.f32 %v623, 0.5
        %v632 = vmul.f32 %v624, 0.5
        %v633 = vmul.f32 %v625, 0.5
        %v634 = vmul.f32 %v626, 0.5
        %v635 = vmul.f32 %v627, 0.5
        %v636 = vtanh.pop %v628
        %v637 = vtanh.pop %v629
        %v638 = vtanh.pop %v630
        %v639 = vtanh.pop %v631
        %v640 = vtanh.pop %v632
        %v641 = vtanh.pop %v633
        %v642 = vtanh.pop %v634
        %v643 = vtanh.pop %v635
        %v644 = vadd.f32 %v636, 1.0
        %v645 = vadd.f32 %v637, 1.0
        %v646 = vadd.f32 %v638, 1.0
        %v647 = vadd.f32 %v639, 1.0
        %v648 = vadd.f32 %v640, 1.0
        %v649 = vadd.f32 %v641, 1.0
        %v650 = vadd.f32 %v642, 1.0
        %v651 = vadd.f32 %v643, 1.0
        %v652 = vmul.f32 %v644, 0.5
        %v653 = vmul.f32 %v645, 0.5
        %v654 = vmul.f32 %v646, 0.5
        %v655 = vmul.f32 %v647, 0.5
        %v656 = vmul.f32 %v648, 0.5
        %v657 = vmul.f32 %v649, 0.5
        %v658 = vmul.f32 %v650, 0.5
        %v659 = vmul.f32 %v651, 0.5
        %v660 = vld [vmem:[%s3] sm:$0xff]
        %v661 = vld [vmem:[%s3 + $0x8] sm:$0xff]
        %v662 = vld [vmem:[%s3 + $0x10] sm:$0xff]
        %v663 = vld [vmem:[%s3 + $0x18] sm:$0xff]
        %v664 = vld [vmem:[%s4] sm:$0xff]
        %v665 = vld [vmem:[%s4 + $0x8] sm:$0xff]
        %v666 = vld [vmem:[%s4 + $0x10] sm:$0xff]
        %v667 = vld [vmem:[%s4 + $0x18] sm:$0xff]
        %669 = vset.pattern.permute.xlu0 0
        %670 = vperm.xlu0 %669, %v664
        %v671 = vpop.permute.xlu0 %670
        %674 = vset.pattern.permute.xlu0 0
        %675 = vperm.xlu0 %674, %v665
        %v676 = vpop.permute.xlu0 %675
        %679 = vset.pattern.permute.xlu0 0
        %680 = vperm.xlu0 %679, %v666
        %v681 = vpop.permute.xlu0 %680
        %684 = vset.pattern.permute.xlu0 0
        %685 = vperm.xlu0 %684, %v667
        %v686 = vpop.permute.xlu0 %685
        %vm688 = vcmask 261120
        %v690 = vsel %vm688, %v660, 0
        %v693 = vsel %vm688, %v661, 0
        %v696 = vsel %vm688, %v662, 0
        %v699 = vsel %vm688, %v663, 0
        %701 = vmatpush.msra.mxu0 0.0
        %702 = vmatpush.msra.mxu0 0.0
        %703 = vmatpush.msra.mxu0 0.0
        %704 = vmatpush.msra.mxu0 0.0
        %705 = vmatpush.msra.mxu0 0.0
        %706 = vmatpush.msra.mxu0 0.0
        %707 = vmatpush.msra.mxu0 0.0
        %708 = vmatpush.msra.mxu0 0.0
        %709 = vmatpush.msra.mxu0 0.0
        %710 = vmatpush.msra.mxu0 0.0
        %711 = vmatpush.msra.mxu0 0.0
        %712 = vmatpush.msra.mxu0 0.0
        %713 = vmatpush.msra.mxu0 %v658
        %714 = vmatpush.msra.mxu0 %v656
        %715 = vmatpush.msra.mxu0 %v654
        %716 = vmatpush.msra.mxu0 %v652
        %717 = vmatmul.f32.gmra.mxu0 %v690
        %v718 = vpop.f32.mrf.mxu0
        %v719 = vadd.f32 %v671, %v718
        %720 = vmatmul.f32.gmra.mxu0 %v693
        %v721 = vpop.f32.mrf.mxu0
        %v722 = vadd.f32 %v676, %v721
        %723 = vmatmul.f32.gmra.mxu0 %v696
        %v724 = vpop.f32.mrf.mxu0
        %v725 = vadd.f32 %v681, %v724
        %726 = vmatmul.f32.gmra.mxu0 %v699
        %v727 = vpop.f32.mrf.mxu0
        %v728 = vadd.f32 %v686, %v727
        %729 = vdwg.mxu0
        %730 = vmatpush.msra.mxu0 0.0
        %731 = vmatpush.msra.mxu0 0.0
        %732 = vmatpush.msra.mxu0 0.0
        %733 = vmatpush.msra.mxu0 0.0
        %734 = vmatpush.msra.mxu0 0.0
        %735 = vmatpush.msra.mxu0 0.0
        %736 = vmatpush.msra.mxu0 0.0
        %737 = vmatpush.msra.mxu0 0.0
        %738 = vmatpush.msra.mxu0 0.0
        %739 = vmatpush.msra.mxu0 0.0
        %740 = vmatpush.msra.mxu0 0.0
        %741 = vmatpush.msra.mxu0 0.0
        %742 = vmatpush.msra.mxu0 %v659
        %743 = vmatpush.msra.mxu0 %v657
        %744 = vmatpush.msra.mxu0 %v655
        %745 = vmatpush.msra.mxu0 %v653
        %746 = vmatmul.f32.gmra.mxu0 %v690
        %v747 = vpop.f32.mrf.mxu0
        %v748 = vadd.f32 %v671, %v747
        %749 = vmatmul.f32.gmra.mxu0 %v693
        %v750 = vpop.f32.mrf.mxu0
        %v751 = vadd.f32 %v676, %v750
        %752 = vmatmul.f32.gmra.mxu0 %v696
        %v753 = vpop.f32.mrf.mxu0
        %v754 = vadd.f32 %v681, %v753
        %755 = vmatmul.f32.gmra.mxu0 %v699
        %v756 = vpop.f32.mrf.mxu0
        %v757 = vadd.f32 %v686, %v756
        %758 = vdwg.mxu0
        %v759 = vmul.f32 %v719, 0.5
        %v760 = vmul.f32 %v748, 0.5
        %v761 = vmul.f32 %v722, 0.5
        %v762 = vmul.f32 %v751, 0.5
        %v763 = vmul.f32 %v725, 0.5
        %v764 = vmul.f32 %v754, 0.5
        %v765 = vmul.f32 %v728, 0.5
        %v766 = vmul.f32 %v757, 0.5
        %v767 = vtanh.pop %v759
        %v768 = vtanh.pop %v760
        %v769 = vtanh.pop %v761
        %v770 = vtanh.pop %v762
        %v771 = vtanh.pop %v763
        %v772 = vtanh.pop %v764
        %v773 = vtanh.pop %v765
        %v774 = vtanh.pop %v766
        %v775 = vadd.f32 %v767, 1.0
        %v776 = vadd.f32 %v768, 1.0
        %v777 = vadd.f32 %v769, 1.0
        %v778 = vadd.f32 %v770, 1.0
        %v779 = vadd.f32 %v771, 1.0
        %v780 = vadd.f32 %v772, 1.0
        %v781 = vadd.f32 %v773, 1.0
        %v782 = vadd.f32 %v774, 1.0
        %v783 = vmul.f32 %v775, 0.5
        %v784 = vmul.f32 %v776, 0.5
        %v785 = vmul.f32 %v777, 0.5
        %v786 = vmul.f32 %v778, 0.5
        %v787 = vmul.f32 %v779, 0.5
        %v788 = vmul.f32 %v780, 0.5
        %v789 = vmul.f32 %v781, 0.5
        %v790 = vmul.f32 %v782, 0.5
        %v791 = vld [vmem:[%s5] sm:$0x1]
        %v792 = vld [vmem:[#allocation2] sm:$0x1]
        %794 = vset.pattern.permute.xlu0 0
        %795 = vperm.xlu0 %794, %v792
        %v796 = vpop.permute.xlu0 %795
        %v798 = vperm.slane %v796, 0
        %v800 = vsel %vm688, %v791, 0
        %802 = vmatpush.msra.mxu0 0.0
        %803 = vmatpush.msra.mxu0 0.0
        %804 = vmatpush.msra.mxu0 0.0
        %805 = vmatpush.msra.mxu0 0.0
        %806 = vmatpush.msra.mxu0 0.0
        %807 = vmatpush.msra.mxu0 0.0
        %808 = vmatpush.msra.mxu0 0.0
        %809 = vmatpush.msra.mxu0 0.0
        %810 = vmatpush.msra.mxu0 0.0
        %811 = vmatpush.msra.mxu0 0.0
        %812 = vmatpush.msra.mxu0 0.0
        %813 = vmatpush.msra.mxu0 0.0
        %814 = vmatpush.msra.mxu0 %v789
        %815 = vmatpush.msra.mxu0 %v787
        %816 = vmatpush.msra.mxu0 %v785
        %817 = vmatpush.msra.mxu0 %v783
        %818 = vmatmul.f32.gmra.mxu0 %v800
        %v819 = vpop.f32.mrf.mxu0
        %v820 = vadd.f32 %v798, %v819
        %821 = vdwg.mxu0
        %822 = vmatpush.msra.mxu0 0.0
        %823 = vmatpush.msra.mxu0 0.0
        %824 = vmatpush.msra.mxu0 0.0
        %825 = vmatpush.msra.mxu0 0.0
        %826 = vmatpush.msra.mxu0 0.0
        %827 = vmatpush.msra.mxu0 0.0
        %828 = vmatpush.msra.mxu0 0.0
        %829 = vmatpush.msra.mxu0 0.0
        %830 = vmatpush.msra.mxu0 0.0
        %831 = vmatpush.msra.mxu0 0.0
        %832 = vmatpush.msra.mxu0 0.0
        %833 = vmatpush.msra.mxu0 0.0
        %834 = vmatpush.msra.mxu0 %v790
        %835 = vmatpush.msra.mxu0 %v788
        %836 = vmatpush.msra.mxu0 %v786
        %837 = vmatpush.msra.mxu0 %v784
        %838 = vmatmul.f32.gmra.mxu0 %v800
        %v839 = vpop.f32.mrf.mxu0
        %v840 = vadd.f32 %v798, %v839
        %841 = vdwg.mxu0
        %v842 = vrot.slane %v556, 7
        %v843 = vrot.slane %v842, 4
        %v845 = vsub.f32 %v556, %v843
        %v846 = vmul.f32 %v845, %v845
        %v847 = vmul.f32 %v556, %v556
        %v849 = vrot.slane %v847, 5
        %v850 = vrot.slane %v849, 4
        %v852 = vadd.f32 %v846, %v850
        %v853 = vrot.slane %v847, 6
        %v854 = vrot.slane %v853, 4
        %v856 = vadd.f32 %v852, %v854
        %v857 = vrsqrt.pop %v856
        %v858 = vmul.f32 %v857, %v856
        %v859 = vmul.f32 %v858, %v857
        %v860 = vmul.f32 0.5, %v859
        %v861 = vsub.f32 1.5, %v860
        %v862 = vmul.f32 %v857, %v861
        %v863 = vmul.f32 %v856, %v862
        %vm864 = vcmp.eq.f32.partialorder %v856, inf
        %v865 = vsel %vm864, %v856, %v863
        %vm866 = vcmp.eq.f32.partialorder %v856, 0.0
        %v867 = vand.u32 %v856, 2147483648
        %v868 = vsel %vm866, %v867, %v865
        %v869 = vadd.f32 %v556, %v843
        %v870 = vmul.f32 %v869, %v869
        %v871 = vadd.f32 %v556, 0.0
        %v872 = vmul.f32 %v871, %v871
        %v874 = vrot.slane %v872, 5
        %v875 = vrot.slane %v874, 4
        %v877 = vadd.f32 %v870, %v875
        %v878 = vrot.slane %v872, 6
        %v879 = vrot.slane %v878, 4
        %v881 = vadd.f32 %v877, %v879
        %v882 = vrsqrt.pop %v881
        %v883 = vmul.f32 %v882, %v881
        %v884 = vmul.f32 %v883, %v882
        %v885 = vmul.f32 0.5, %v884
        %v886 = vsub.f32 1.5, %v885
        %v887 = vmul.f32 %v882, %v886
        %v888 = vmul.f32 %v881, %v887
        %vm889 = vcmp.eq.f32.partialorder %v881, inf
        %v890 = vsel %vm889, %v881, %v888
        %vm891 = vcmp.eq.f32.partialorder %v881, 0.0
        %v892 = vand.u32 %v881, 2147483648
        %v893 = vsel %vm891, %v892, %v890
        %v894 = vsub.f32 0.0, %v868
        %v895 = vmul.f32 %v894, 1.442695
        %v896 = vpow.pop %v895
        %v897 = vsub.f32 0.0, %v893
        %v898 = vmul.f32 %v897, 1.442695
        %v899 = vpow.pop %v898
        %v900 = vsub.f32 0.0, %v556
        %v901 = vsub.f32 %v900, %v843
        %v902 = vmul.f32 %v901, %v901
        %v903 = vadd.f32 %v902, %v850
        %v904 = vadd.f32 %v903, %v854
        %v905 = vrsqrt.pop %v904
        %v906 = vmul.f32 %v905, %v904
        %v907 = vmul.f32 %v906, %v905
        %v908 = vmul.f32 0.5, %v907
        %v909 = vsub.f32 1.5, %v908
        %v910 = vmul.f32 %v905, %v909
        %v911 = vmul.f32 %v904, %v910
        %vm912 = vcmp.eq.f32.partialorder %v904, inf
        %v913 = vsel %vm912, %v904, %v911
        %vm914 = vcmp.eq.f32.partialorder %v904, 0.0
        %v915 = vand.u32 %v904, 2147483648
        %v916 = vsel %vm914, %v915, %v913
        %v917 = vadd.f32 %v900, %v843
        %v918 = vmul.f32 %v917, %v917
        %v919 = vadd.f32 %v918, %v875
        %v920 = vadd.f32 %v919, %v879
        %v921 = vrsqrt.pop %v920
        %v922 = vmul.f32 %v921, %v920
        %v923 = vmul.f32 %v922, %v921
        %v924 = vmul.f32 0.5, %v923
        %v925 = vsub.f32 1.5, %v924
        %v926 = vmul.f32 %v921, %v925
        %v927 = vmul.f32 %v920, %v926
        %vm928 = vcmp.eq.f32.partialorder %v920, inf
        %v929 = vsel %vm928, %v920, %v927
        %vm930 = vcmp.eq.f32.partialorder %v920, 0.0
        %v931 = vand.u32 %v920, 2147483648
        %v932 = vsel %vm930, %v931, %v929
        %v933 = vsub.f32 0.0, %v916
        %v934 = vmul.f32 %v933, 1.442695
        %v935 = vpow.pop %v934
        %v936 = vsub.f32 0.0, %v932
        %v937 = vmul.f32 %v936, 1.442695
        %v938 = vpow.pop %v937
        %v939 = vadd.f32 %v896, %v899
        %v940 = vld [vmem:[%s7] sm:$0xff]
        %v941 = vld [vmem:[%s7 + $0x8] sm:$0xff]
        %v942 = vld [vmem:[%s8] sm:$0xff]
        %v943 = vld [vmem:[%s8 + $0x8] sm:$0xff]
        %945 = vset.pattern.permute.xlu0 0
        %946 = vperm.xlu0 %945, %v940
        %v947 = vpop.permute.xlu0 %946
        %950 = vset.pattern.permute.xlu0 0
        %951 = vperm.xlu0 %950, %v941
        %v952 = vpop.permute.xlu0 %951
        %v955 = vperm.slane %v896, 0
        %v956 = vperm.slane %v896, 4
        %v959 = vperm.slane %v955, 0
        %v960 = vperm.slane %v956, 0
        %v961 = vmul.f32 %v947, %v959
        %v962 = vmul.f32 %v947, %v960
        %v963 = vmul.f32 %v952, %v959
        %v964 = vmul.f32 %v952, %v960
        %965 = vset.pattern.permute.xlu0 1
        %966 = vperm.xlu0 %965, %v940
        %v967 = vpop.permute.xlu0 %966
        %969 = vset.pattern.permute.xlu0 1
        %970 = vperm.xlu0 %969, %v941
        %v971 = vpop.permute.xlu0 %970
        %v974 = vperm.slane %v899, 0
        %v975 = vperm.slane %v899, 4
        %v978 = vperm.slane %v974, 0
        %v979 = vperm.slane %v975, 0
        %v980 = vmul.f32 %v967, %v978
        %v981 = vmul.f32 %v967, %v979
        %v982 = vmul.f32 %v971, %v978
        %v983 = vmul.f32 %v971, %v979
        %v984 = vadd.f32 %v961, %v980
        %v985 = vadd.f32 %v962, %v981
        %v986 = vadd.f32 %v963, %v982
        %v987 = vadd.f32 %v964, %v983
        %989 = vset.pattern.permute.xlu0 0
        %990 = vperm.xlu0 %989, %v942
        %v991 = vpop.permute.xlu0 %990
        %994 = vset.pattern.permute.xlu0 0
        %995 = vperm.xlu0 %994, %v943
        %v996 = vpop.permute.xlu0 %995
        %v998 = vadd.f32 %v984, %v991
        %v999 = vadd.f32 %v985, %v991
        %v1000 = vadd.f32 %v986, %v996
        %v1001 = vadd.f32 %v987, %v996
        %v1002 = vmul.f32 %v998, 0.5
        %v1003 = vmul.f32 %v999, 0.5
        %v1004 = vmul.f32 %v1000, 0.5
        %v1005 = vmul.f32 %v1001, 0.5
        %v1006 = vtanh.pop %v1002
        %v1007 = vtanh.pop %v1003
        %v1008 = vtanh.pop %v1004
        %v1009 = vtanh.pop %v1005
        %v1010 = vadd.f32 %v1006, 1.0
        %v1011 = vadd.f32 %v1007, 1.0
        %v1012 = vadd.f32 %v1008, 1.0
        %v1013 = vadd.f32 %v1009, 1.0
        %v1014 = vmul.f32 %v1010, 0.5
        %v1015 = vmul.f32 %v1011, 0.5
        %v1016 = vmul.f32 %v1012, 0.5
        %v1017 = vmul.f32 %v1013, 0.5
        %v1019 = vperm.slane %v935, 0
        %v1020 = vperm.slane %v935, 4
        %v1023 = vperm.slane %v1019, 0
        %v1024 = vperm.slane %v1020, 0
        %v1025 = vmul.f32 %v947, %v1023
        %v1026 = vmul.f32 %v947, %v1024
        %v1027 = vmul.f32 %v952, %v1023
        %v1028 = vmul.f32 %v952, %v1024
        %v1030 = vperm.slane %v938, 0
        %v1031 = vperm.slane %v938, 4
        %v1034 = vperm.slane %v1030, 0
        %v1035 = vperm.slane %v1031, 0
        %v1036 = vmul.f32 %v967, %v1034
        %v1037 = vmul.f32 %v967, %v1035
        %v1038 = vmul.f32 %v971, %v1034
        %v1039 = vmul.f32 %v971, %v1035
        %v1040 = vadd.f32 %v1025, %v1036
        %v1041 = vadd.f32 %v1026, %v1037
        %v1042 = vadd.f32 %v1027, %v1038
        %v1043 = vadd.f32 %v1028, %v1039
        %v1044 = vadd.f32 %v1040, %v991
        %v1045 = vadd.f32 %v1041, %v991
        %v1046 = vadd.f32 %v1042, %v996
        %v1047 = vadd.f32 %v1043, %v996
        %v1048 = vmul.f32 %v1044, 0.5
        %v1049 = vmul.f32 %v1045, 0.5
        %v1050 = vmul.f32 %v1046, 0.5
        %v1051 = vmul.f32 %v1047, 0.5
        %v1052 = vtanh.pop %v1048
        %v1053 = vtanh.pop %v1049
        %v1054 = vtanh.pop %v1050
        %v1055 = vtanh.pop %v1051
        %v1056 = vadd.f32 %v1052, 1.0
        %v1057 = vadd.f32 %v1053, 1.0
        %v1058 = vadd.f32 %v1054, 1.0
        %v1059 = vadd.f32 %v1055, 1.0
        %v1060 = vmul.f32 %v1056, 0.5
        %v1061 = vmul.f32 %v1057, 0.5
        %v1062 = vmul.f32 %v1058, 0.5
        %v1063 = vmul.f32 %v1059, 0.5
        %v1064 = vld [vmem:[%s9] sm:$0xff]
        %v1065 = vld [vmem:[%s9 + $0x8] sm:$0xff]
        %v1066 = vld [vmem:[%s10] sm:$0xff]
        %v1067 = vld [vmem:[%s10 + $0x8] sm:$0xff]
        %1069 = vset.pattern.permute.xlu0 0
        %1070 = vperm.xlu0 %1069, %v1066
        %v1071 = vpop.permute.xlu0 %1070
        %1074 = vset.pattern.permute.xlu0 0
        %1075 = vperm.xlu0 %1074, %v1067
        %v1076 = vpop.permute.xlu0 %1075
        %vm1078 = vcmask 130048
        %v1080 = vsel %vm1078, %v1064, 0
        %v1083 = vsel %vm1078, %v1065, 0
        %1085 = vmatpush.msra.mxu0 0.0
        %1086 = vmatpush.msra.mxu0 0.0
        %1087 = vmatpush.msra.mxu0 0.0
        %1088 = vmatpush.msra.mxu0 0.0
        %1089 = vmatpush.msra.mxu0 0.0
        %1090 = vmatpush.msra.mxu0 0.0
        %1091 = vmatpush.msra.mxu0 0.0
        %1092 = vmatpush.msra.mxu0 0.0
        %1093 = vmatpush.msra.mxu0 0.0
        %1094 = vmatpush.msra.mxu0 0.0
        %1095 = vmatpush.msra.mxu0 0.0
        %1096 = vmatpush.msra.mxu0 0.0
        %1097 = vmatpush.msra.mxu0 0.0
        %1098 = vmatpush.msra.mxu0 0.0
        %1099 = vmatpush.msra.mxu0 %v1016
        %1100 = vmatpush.msra.mxu0 %v1014
        %1101 = vmatmul.f32.gmra.mxu0 %v1080
        %v1102 = vpop.f32.mrf.mxu0
        %v1103 = vadd.f32 %v1071, %v1102
        %1104 = vmatmul.f32.gmra.mxu0 %v1083
        %v1105 = vpop.f32.mrf.mxu0
        %v1106 = vadd.f32 %v1076, %v1105
        %1107 = vdwg.mxu0
        %1108 = vmatpush.msra.mxu0 0.0
        %1109 = vmatpush.msra.mxu0 0.0
        %1110 = vmatpush.msra.mxu0 0.0
        %1111 = vmatpush.msra.mxu0 0.0
        %1112 = vmatpush.msra.mxu0 0.0
        %1113 = vmatpush.msra.mxu0 0.0
        %1114 = vmatpush.msra.mxu0 0.0
        %1115 = vmatpush.msra.mxu0 0.0
        %1116 = vmatpush.msra.mxu0 0.0
        %1117 = vmatpush.msra.mxu0 0.0
        %1118 = vmatpush.msra.mxu0 0.0
        %1119 = vmatpush.msra.mxu0 0.0
        %1120 = vmatpush.msra.mxu0 0.0
        %1121 = vmatpush.msra.mxu0 0.0
        %1122 = vmatpush.msra.mxu0 %v1017
        %1123 = vmatpush.msra.mxu0 %v1015
        %1124 = vmatmul.f32.gmra.mxu0 %v1080
        %v1125 = vpop.f32.mrf.mxu0
        %v1126 = vadd.f32 %v1071, %v1125
        %1127 = vmatmul.f32.gmra.mxu0 %v1083
        %v1128 = vpop.f32.mrf.mxu0
        %v1129 = vadd.f32 %v1076, %v1128
        %1130 = vdwg.mxu0
        %1131 = vmatpush.msra.mxu0 0.0
        %1132 = vmatpush.msra.mxu0 0.0
        %1133 = vmatpush.msra.mxu0 0.0
        %1134 = vmatpush.msra.mxu0 0.0
        %1135 = vmatpush.msra.mxu0 0.0
        %1136 = vmatpush.msra.mxu0 0.0
        %1137 = vmatpush.msra.mxu0 0.0
        %1138 = vmatpush.msra.mxu0 0.0
        %1139 = vmatpush.msra.mxu0 0.0
        %1140 = vmatpush.msra.mxu0 0.0
        %1141 = vmatpush.msra.mxu0 0.0
        %1142 = vmatpush.msra.mxu0 0.0
        %1143 = vmatpush.msra.mxu0 0.0
        %1144 = vmatpush.msra.mxu0 0.0
        %1145 = vmatpush.msra.mxu0 %v1062
        %1146 = vmatpush.msra.mxu0 %v1060
        %1147 = vmatmul.f32.gmra.mxu0 %v1080
        %v1148 = vpop.f32.mrf.mxu0
        %v1149 = vadd.f32 %v1071, %v1148
        %1150 = vmatmul.f32.gmra.mxu0 %v1083
        %v1151 = vpop.f32.mrf.mxu0
        %v1152 = vadd.f32 %v1076, %v1151
        %1153 = vdwg.mxu0
        %1154 = vmatpush.msra.mxu0 0.0
        %1155 = vmatpush.msra.mxu0 0.0
        %1156 = vmatpush.msra.mxu0 0.0
        %1157 = vmatpush.msra.mxu0 0.0
        %1158 = vmatpush.msra.mxu0 0.0
        %1159 = vmatpush.msra.mxu0 0.0
        %1160 = vmatpush.msra.mxu0 0.0
        %1161 = vmatpush.msra.mxu0 0.0
        %1162 = vmatpush.msra.mxu0 0.0
        %1163 = vmatpush.msra.mxu0 0.0
        %1164 = vmatpush.msra.mxu0 0.0
        %1165 = vmatpush.msra.mxu0 0.0
        %1166 = vmatpush.msra.mxu0 0.0
        %1167 = vmatpush.msra.mxu0 0.0
        %1168 = vmatpush.msra.mxu0 %v1063
        %1169 = vmatpush.msra.mxu0 %v1061
        %1170 = vmatmul.f32.gmra.mxu0 %v1080
        %v1171 = vpop.f32.mrf.mxu0
        %v1172 = vadd.f32 %v1071, %v1171
        %1173 = vmatmul.f32.gmra.mxu0 %v1083
        %v1174 = vpop.f32.mrf.mxu0
        %v1175 = vadd.f32 %v1076, %v1174
        %1176 = vdwg.mxu0
        %v1177 = vmul.f32 %v1103, 0.5
        %v1178 = vmul.f32 %v1126, 0.5
        %v1179 = vmul.f32 %v1149, 0.5
        %v1180 = vmul.f32 %v1172, 0.5
        %v1181 = vmul.f32 %v1106, 0.5
        %v1182 = vmul.f32 %v1129, 0.5
        %v1183 = vmul.f32 %v1152, 0.5
        %v1184 = vmul.f32 %v1175, 0.5
        %v1185 = vtanh.pop %v1177
        %v1186 = vtanh.pop %v1178
        %v1187 = vtanh.pop %v1179
        %v1188 = vtanh.pop %v1180
        %v1189 = vtanh.pop %v1181
        %v1190 = vtanh.pop %v1182
        %v1191 = vtanh.pop %v1183
        %v1192 = vtanh.pop %v1184
        %v1193 = vadd.f32 %v1185, 1.0
        %v1194 = vadd.f32 %v1186, 1.0
        %v1195 = vadd.f32 %v1187, 1.0
        %v1196 = vadd.f32 %v1188, 1.0
        %v1197 = vadd.f32 %v1189, 1.0
        %v1198 = vadd.f32 %v1190, 1.0
        %v1199 = vadd.f32 %v1191, 1.0
        %v1200 = vadd.f32 %v1192, 1.0
        %v1201 = vmul.f32 %v1193, 0.5
        %v1202 = vmul.f32 %v1194, 0.5
        %v1203 = vmul.f32 %v1195, 0.5
        %v1204 = vmul.f32 %v1196, 0.5
        %v1205 = vmul.f32 %v1197, 0.5
        %v1206 = vmul.f32 %v1198, 0.5
        %v1207 = vmul.f32 %v1199, 0.5
        %v1208 = vmul.f32 %v1200, 0.5
        %v1209 = vadd.f32 %v1201, %v1203
        %v1210 = vadd.f32 %v1202, %v1204
        %v1211 = vadd.f32 %v1205, %v1207
        %v1212 = vadd.f32 %v1206, %v1208
        %v1213 = vld [vmem:[%s11] sm:$0x1]
        %v1214 = vld [vmem:[#allocation3] sm:$0x1]
        %1216 = vset.pattern.permute.xlu0 0
        %1217 = vperm.xlu0 %1216, %v1214
        %v1218 = vpop.permute.xlu0 %1217
        %v1220 = vperm.slane %v1218, 0
        %v1222 = vsel %vm1078, %v1213, 0
        %1224 = vmatpush.msra.mxu0 0.0
        %1225 = vmatpush.msra.mxu0 0.0
        %1226 = vmatpush.msra.mxu0 0.0
        %1227 = vmatpush.msra.mxu0 0.0
        %1228 = vmatpush.msra.mxu0 0.0
        %1229 = vmatpush.msra.mxu0 0.0
        %1230 = vmatpush.msra.mxu0 0.0
        %1231 = vmatpush.msra.mxu0 0.0
        %1232 = vmatpush.msra.mxu0 0.0
        %1233 = vmatpush.msra.mxu0 0.0
        %1234 = vmatpush.msra.mxu0 0.0
        %1235 = vmatpush.msra.mxu0 0.0
        %1236 = vmatpush.msra.mxu0 0.0
        %1237 = vmatpush.msra.mxu0 0.0
        %1238 = vmatpush.msra.mxu0 %v1211
        %1239 = vmatpush.msra.mxu0 %v1209
        %1240 = vmatmul.f32.gmra.mxu0 %v1222
        %v1241 = vpop.f32.mrf.mxu0
        %v1242 = vadd.f32 %v1220, %v1241
        %1243 = vdwg.mxu0
        %1244 = vmatpush.msra.mxu0 0.0
        %1245 = vmatpush.msra.mxu0 0.0
        %1246 = vmatpush.msra.mxu0 0.0
        %1247 = vmatpush.msra.mxu0 0.0
        %1248 = vmatpush.msra.mxu0 0.0
        %1249 = vmatpush.msra.mxu0 0.0
        %1250 = vmatpush.msra.mxu0 0.0
        %1251 = vmatpush.msra.mxu0 0.0
        %1252 = vmatpush.msra.mxu0 0.0
        %1253 = vmatpush.msra.mxu0 0.0
        %1254 = vmatpush.msra.mxu0 0.0
        %1255 = vmatpush.msra.mxu0 0.0
        %1256 = vmatpush.msra.mxu0 0.0
        %1257 = vmatpush.msra.mxu0 0.0
        %1258 = vmatpush.msra.mxu0 %v1212
        %1259 = vmatpush.msra.mxu0 %v1210
        %1260 = vmatmul.f32.gmra.mxu0 %v1222
        %v1261 = vpop.f32.mrf.mxu0
        %v1262 = vadd.f32 %v1220, %v1261
        %1263 = vdwg.mxu0
        %v1264 = vld [vmem:[%s13] sm:$0xff]
        %v1265 = vld [vmem:[%s13 + $0x8] sm:$0x3]
        %1267 = vset.pattern.permute.xlu0 0
        %1268 = vperm.xlu0 %1267, %v1264
        %v1269 = vpop.permute.xlu0 %1268
        %1272 = vset.pattern.permute.xlu0 0
        %1273 = vperm.xlu0 %1272, %v1265
        %v1274 = vpop.permute.xlu0 %1273
        %v1276 = vmul.f32 %v1269, %v586
        %v1277 = vmul.f32 %v1269, %v587
        %v1278 = vmul.f32 %v1274, %v586
        %v1279 = vmul.f32 %v1274, %v587
        %v1280 = vld [vmem:[%s14] sm:$0xff]
        %v1281 = vld [vmem:[%s14 + $0x8] sm:$0x3]
        %1283 = vset.pattern.permute.xlu0 0
        %1284 = vperm.xlu0 %1283, %v1280
        %v1285 = vpop.permute.xlu0 %1284
        %1288 = vset.pattern.permute.xlu0 0
        %1289 = vperm.xlu0 %1288, %v1281
        %v1290 = vpop.permute.xlu0 %1289
        %v1292 = vadd.f32 %v1276, %v1285
        %v1293 = vadd.f32 %v1277, %v1285
        %v1294 = vadd.f32 %v1278, %v1290
        %v1295 = vadd.f32 %v1279, %v1290
        %v1296 = vmul.f32 %v1292, 0.5
        %v1297 = vmul.f32 %v1293, 0.5
        %v1298 = vmul.f32 %v1294, 0.5
        %v1299 = vmul.f32 %v1295, 0.5
        %v1300 = vtanh.pop %v1296
        %v1301 = vtanh.pop %v1297
        %v1302 = vtanh.pop %v1298
        %v1303 = vtanh.pop %v1299
        %v1304 = vadd.f32 %v1300, 1.0
        %v1305 = vadd.f32 %v1301, 1.0
        %v1306 = vadd.f32 %v1302, 1.0
        %v1307 = vadd.f32 %v1303, 1.0
        %v1308 = vmul.f32 %v1304, 0.5
        %v1309 = vmul.f32 %v1305, 0.5
        %v1310 = vmul.f32 %v1306, 0.5
        %v1311 = vmul.f32 %v1307, 0.5
        %v1312 = vld [vmem:[%s15] sm:$0x1]
        %v1313 = vld [vmem:[#allocation4] sm:$0x1]
        %1315 = vset.pattern.permute.xlu0 0
        %1316 = vperm.xlu0 %1315, %v1313
        %v1317 = vpop.permute.xlu0 %1316
        %v1319 = vperm.slane %v1317, 0
        %vm1320 = vcmask 80896
        %v1322 = vsel %vm1320, %v1312, 0
        %vm1324 = vcmask 1041408
        %v1326 = vsel %vm1324, %v1310, 0
        %v1329 = vsel %vm1324, %v1311, 0
        %1331 = vmatpush.msra.mxu0 0.0
        %1332 = vmatpush.msra.mxu0 0.0
        %1333 = vmatpush.msra.mxu0 0.0
        %1334 = vmatpush.msra.mxu0 0.0
        %1335 = vmatpush.msra.mxu0 0.0
        %1336 = vmatpush.msra.mxu0 0.0
        %1337 = vmatpush.msra.mxu0 0.0
        %1338 = vmatpush.msra.mxu0 0.0
        %1339 = vmatpush.msra.mxu0 0.0
        %1340 = vmatpush.msra.mxu0 0.0
        %1341 = vmatpush.msra.mxu0 0.0
        %1342 = vmatpush.msra.mxu0 0.0
        %1343 = vmatpush.msra.mxu0 0.0
        %1344 = vmatpush.msra.mxu0 0.0
        %1345 = vmatpush.msra.mxu0 %v1326
        %1346 = vmatpush.msra.mxu0 %v1308
        %1347 = vmatmul.f32.gmra.mxu0 %v1322
        %v1348 = vpop.f32.mrf.mxu0
        %v1349 = vadd.f32 %v1319, %v1348
        %1350 = vdwg.mxu0
        %1351 = vmatpush.msra.mxu0 0.0
        %1352 = vmatpush.msra.mxu0 0.0
        %1353 = vmatpush.msra.mxu0 0.0
        %1354 = vmatpush.msra.mxu0 0.0
        %1355 = vmatpush.msra.mxu0 0.0
        %1356 = vmatpush.msra.mxu0 0.0
        %1357 = vmatpush.msra.mxu0 0.0
        %1358 = vmatpush.msra.mxu0 0.0
        %1359 = vmatpush.msra.mxu0 0.0
        %1360 = vmatpush.msra.mxu0 0.0
        %1361 = vmatpush.msra.mxu0 0.0
        %1362 = vmatpush.msra.mxu0 0.0
        %1363 = vmatpush.msra.mxu0 0.0
        %1364 = vmatpush.msra.mxu0 0.0
        %1365 = vmatpush.msra.mxu0 %v1329
        %1366 = vmatpush.msra.mxu0 %v1309
        %1367 = vmatmul.f32.gmra.mxu0 %v1322
        %v1368 = vpop.f32.mrf.mxu0
        %v1369 = vadd.f32 %v1319, %v1368
        %1370 = vdwg.mxu0
        %v1371 = vmul.f32 %v1242, %v1349
        %v1372 = vmul.f32 %v1262, %v1369
        %v1374 = vperm.slane %v939, 0
        %v1375 = vperm.slane %v939, 4
        %v1378 = vadd.f32 %v1371, %v1374
        %v1379 = vadd.f32 %v1372, %v1375
        %v1382 = vrot.slane %v820, 7
        %v1383 = vrot.slane %v840, 7
        %vm1386 = vcmask 1040384
        %v1387 = vsel %vm1386, %v1378, %v1382
        %v1388 = vsel %vm1386, %v1379, %v1383
        %v1389 = vsel %vm1324, %v1387, %v955
        %v1390 = vsel %vm1324, %v1388, %v956
        %vm1391 = vcmask 1042432
        %v1392 = vsel %vm1391, %v1389, %v974
        %v1393 = vsel %vm1391, %v1390, %v975
        %v1396 = vrot.slane %v1393, 4
        %vm1397 = vcmask 1043456
        %v1398 = vsel %vm1397, %v1392, %v1396
        %1400 = vst [vmem:[%s548] sm:$0xff] %v1398
        %s1401 = sand.u32 %s407, 1
        %s1402 = scalar_lea.sflag [#allocation6], %s1401
        %s1403 = sand.u32 %s407, 1
        %s1404 = smul.addr %s1403, 8
        %s1405 = scalar_lea.vmem [#allocation5], %s1404
        // Predicated region
        $region89: #{tpu_custom_call.1} parent=87 // pred_check
          %p1406 = pneg %p417
        $region90: #{tpu_custom_call.1} parent=87 // pred_check_branch
          %1408 = sbr.rel (%p1406) target = $region92
        $region91: #{tpu_custom_call.1} parent=87 // pred_region
          %s1409 = smul.u32 2, %s37
          %1411 = vsyncadd %s1402, 0
          %s1412 = smul.addr %s1409, 4
          %s1413 = scalar_lea.hbm %s17, %s1412
          %s1415 = sshll.u32 %s1405, 4
          %s1416 = int_to_ptr.vmem [resolvable:$true] %s1415
          %s1417 = sshll.u32 %s1413, 4
          %s1418 = int_to_ptr.hbm [resolvable:$true] %s1417
          %1420 = dma.vmem_to_hbm [thread:$0]  %s1416, 128, %s1418, %s1402
        $region92: #{tpu_custom_call.1} parent=87 // pred_fallthru
          _
      $region88: #{tpu_custom_call.1} parent=5 // pred_fallthru
        _
      %p1421 = scmp.le.s32.totalorder 2, %s32
      // Predicated region
      $region93: #{tpu_custom_call.1} parent=5 // pred_check
        %p1422 = pneg %p1421
      $region94: #{tpu_custom_call.1} parent=5 // pred_check_branch
        %1424 = sbr.rel (%p1422) target = $region96
      $region95: #{tpu_custom_call.1} parent=5 // pred_region
        %s1425 = ssub.s32 %s32, 2
        // Predicated region
        $region97: #{tpu_custom_call.1} parent=95 // pred_check
          %p1426 = pneg %p423
        $region98: #{tpu_custom_call.1} parent=95 // pred_check_branch
          %1428 = sbr.rel (%p1426) target = $region100
        $region99: #{tpu_custom_call.1} parent=95 // pred_region
          %s1429 = sand.u32 %s408, 1
          %s1430 = scalar_lea.sflag [#allocation6], %s1429
          %s1431 = sand.u32 %s408, 1
          %s1432 = smul.addr %s1431, 8
          %s1433 = scalar_lea.vmem [#allocation5], %s1432
          %1435 = dma.done %s1430, 128
        $region100: #{tpu_custom_call.1} parent=95 // pred_fallthru
          _
      $region96: #{tpu_custom_call.1} parent=5 // pred_fallthru
        _
    $region6: #{tpu_custom_call.1} parent=1 // loop_footer
      %s36 = sadd.s32 1, %s32
    $region7: #{tpu_custom_call.1} parent=1 // loop_footer_branch
      %31 = sbr.rel target = $region3
    $region8: #{tpu_custom_call.1} parent=1 // loop_exit
      _
    %1436 = vsyncpa [#allocation6], 1
    %s1437 = scalar_lea.sflag [#allocation6], 1
    %1438 = vsyncpa %s1437, 1

</llo_original>
